<compile_context>
chip_gen: v6e
topology: v6e:2x2x1
jax: 0.10.0
libtpu: 0.0.40
codegen_flags: <defaults>
</compile_context>

<pallas_src>
import functools

import jax
import jax.numpy as jnp
from jax.experimental import pallas as pl
from jax.experimental.pallas import tpu as pltpu

NUM_CLASSES = 3  # fetal IQA uses 3 quality classes

_VMEM = pl.BlockSpec(memory_space=pltpu.MemorySpace.VMEM)


def _round_up(x, m):
    return (x + m - 1) // m * m


def _pick_k_tile(K):
    """Return (tk, K_pad): K padded to a multiple of 128; tk a multiple of 128 dividing K_pad."""
    K_pad = _round_up(K, 128)
    if K_pad <= 768:
        return K_pad, K_pad
    for tk in range(768, 0, -128):
        if K_pad % tk == 0:
            return tk, K_pad
    return 128, K_pad  # unreachable: K_pad is a multiple of 128


# ----------------------------------------------------------------------------
# Pallas kernels
# ----------------------------------------------------------------------------
def _conv_kernel(*refs, relu, has_res):
    # grid = (m, n, k); k is the reduction axis (innermost, "arbitrary").
    if has_res:
        p_ref, w_ref, b_ref, r_ref, o_ref, acc_ref = refs
    else:
        p_ref, w_ref, b_ref, o_ref, acc_ref = refs
        r_ref = None

    k = pl.program_id(2)

    @pl.when(k == 0)
    def _():
        acc_ref[...] = jnp.zeros_like(acc_ref)

    acc_ref[...] += jnp.dot(p_ref[...], w_ref[...],
                            preferred_element_type=jnp.float32)

    @pl.when(k == pl.num_programs(2) - 1)
    def _():
        acc = acc_ref[...] + b_ref[...]
        if has_res:
            acc = acc + r_ref[...].astype(jnp.float32)
        if relu:
            acc = jnp.maximum(acc, 0.0)
        o_ref[...] = acc.astype(o_ref.dtype)


def _maxpool_kernel(*refs):
    # refs = KK shifted views [tm, C] + output [tm, C]; elementwise max over the window taps.
    o_ref = refs[-1]
    acc = refs[0][...]
    for r in refs[1:-1]:
        acc = jnp.maximum(acc, r[...])
    o_ref[...] = acc


def _head_kernel(x_ref, w_ref, b_ref, logits_ref, feat_ref, *, inv_hw):
    # x: [B, HW, C] -> global average pool -> DualFC: (padded logits, features).
    x = x_ref[...].astype(jnp.float32)
    feat = jnp.sum(x, axis=1) * inv_hw            # reduction lowers to XLU, not unrolled adds
    feat_ref[...] = feat
    logits_ref[...] = (
        jnp.dot(feat, w_ref[...], preferred_element_type=jnp.float32) + b_ref[...]
    )


# ----------------------------------------------------------------------------
# Wrappers (JAX glue around the kernels)
# ----------------------------------------------------------------------------
def _im2col(x, kh, kw, stride, padding, pad_value=0.0):
    """x: NHWC -> (patches [B, Ho, Wo, KK, C], Ho, Wo), (kh, kw, c) fastest-varying order."""
    B, H, W, C = x.shape
    Ho = (H + 2 * padding - kh) // stride + 1
    Wo = (W + 2 * padding - kw) // stride + 1
    if kh == 1 and kw == 1 and padding == 0:
        return x[:, ::stride, ::stride, :].reshape(B, Ho, Wo, 1, C), Ho, Wo
    xp = jnp.pad(
        x,
        ((0, 0), (padding, padding), (padding, padding), (0, 0)),
        constant_values=pad_value,
    )
    cols = [
        xp[:, i:i + stride * Ho:stride, j:j + stride * Wo:stride, :]
        for i in range(kh) for j in range(kw)
    ]
    patches = jnp.stack(cols, axis=3)  # [B, Ho, Wo, KK, C]
    return patches, Ho, Wo


def conv_bn(x, w, scale, bias, stride, padding, relu=True, residual=None):
    """Conv2d (no bias) + folded eval-mode BatchNorm [+ residual] [+ ReLU]; NHWC bf16 in/out."""
    B, H, W, Cin = x.shape
    Cout, _, KH, KW = w.shape
    patches, Ho, Wo = _im2col(x, KH, KW, stride, padding, pad_value=0.0)
    M = B * Ho * Wo
    K = KH * KW * Cin

    # Fold BN scale into the weight columns; keep the bias separate in f32.
    wm = (jnp.transpose(w, (2, 3, 1, 0)).reshape(K, Cout).astype(jnp.float32)
          * scale.astype(jnp.float32)[None, :]).astype(jnp.bfloat16)
    b2 = bias.reshape(1, Cout).astype(jnp.float32)

    # Tile plan: multiples of (8, 128); sized conservatively so double-buffered blocks fit the
    # smallest scoped-VMEM budget (v5e 16 MiB / v7x 32 MiB) with plenty of headroom.
    tm = min(512, _round_up(M, 8))
    tn = min(128, Cout)
    tk, K_pad = _pick_k_tile(K)
    M_pad = _round_up(M, tm)

    p = patches.reshape(M, K).astype(jnp.bfloat16)
    p = jnp.pad(p, ((0, M_pad - M), (0, K_pad - K)))
    wm = jnp.pad(wm, ((0, K_pad - K), (0, 0)))

    grid = (M_pad // tm, Cout // tn, K_pad // tk)

    in_specs = [
        pl.BlockSpec((tm, tk), lambda m, n, k: (m, k)),
        pl.BlockSpec((tk, tn), lambda m, n, k: (k, n)),
        pl.BlockSpec((1, tn), lambda m, n, k: (0, n)),
    ]
    args = [p, wm, b2]
    if residual is not None:
        r = jnp.pad(residual.reshape(M, Cout).astype(jnp.bfloat16),
                    ((0, M_pad - M), (0, 0)))
        in_specs.append(pl.BlockSpec((tm, tn), lambda m, n, k: (m, n)))
        args.append(r)

    bytes_accessed = int(
        p.size * 2 + wm.size * 2 + M_pad * Cout * 2
        + (M_pad * Cout * 2 if residual is not None else 0) + Cout * 4
    )

    out = pl.pallas_call(
        functools.partial(_conv_kernel, relu=relu, has_res=residual is not None),
        out_shape=jax.ShapeDtypeStruct((M_pad, Cout), jnp.bfloat16),
        grid=grid,
        in_specs=in_specs,
        out_specs=pl.BlockSpec((tm, tn), lambda m, n, k: (m, n)),
        scratch_shapes=[pltpu.VMEM((tm, tn), jnp.float32)],
        compiler_params=pltpu.CompilerParams(
            dimension_semantics=("parallel", "parallel", "arbitrary")),
        cost_estimate=pl.CostEstimate(
            flops=2 * M_pad * K_pad * Cout,
            transcendentals=0,
            bytes_accessed=bytes_accessed),
    )(*args)
    return out[:M].reshape(B, Ho, Wo, Cout)


def maxpool(x, k=3, stride=2, padding=1):
    """MaxPool2d(k, stride, padding), NHWC bf16; tiled over output rows, lane-parallel over C."""
    B, H, W, C = x.shape
    Ho = (H + 2 * padding - k) // stride + 1
    Wo = (W + 2 * padding - k) // stride + 1
    xp = jnp.pad(
        x, ((0, 0), (padding, padding), (padding, padding), (0, 0)),
        constant_values=-jnp.inf,
    )
    M = B * Ho * Wo
    tm = min(512, _round_up(M, 8))
    M_pad = _round_up(M, tm)
    views = []
    for i in range(k):
        for j in range(k):
            v = xp[:, i:i + stride * Ho:stride, j:j + stride * Wo:stride, :]
            views.append(jnp.pad(v.reshape(M, C), ((0, M_pad - M), (0, 0))))

    out = pl.pallas_call(
        _maxpool_kernel,
        out_shape=jax.ShapeDtypeStruct((M_pad, C), x.dtype),
        grid=(M_pad // tm,),
        in_specs=[pl.BlockSpec((tm, C), lambda m: (m, 0))] * (k * k),
        out_specs=pl.BlockSpec((tm, C), lambda m: (m, 0)),
        compiler_params=pltpu.CompilerParams(dimension_semantics=("parallel",)),
    )(*views)
    return out[:M].reshape(B, Ho, Wo, C)


def basic_block(x, p):
    stride = p["stride"]
    identity = x
    out = conv_bn(x, p["conv1_w"], p["bn1_s"], p["bn1_b"], stride, 1, relu=True)
    if "down_w" in p:
        identity = conv_bn(x, p["down_w"], p["dbn_s"], p["dbn_b"], stride, 0, relu=False)
    out = conv_bn(
        out, p["conv2_w"], p["bn2_s"], p["bn2_b"], 1, 1, relu=False, residual=identity
    )
    return out


def pretrained_model_forward(x_nchw, params):
    """Equivalent of PretrainedModel.forward for model_name='resnet18'.

    Returns (logits [B, num_classes], features [B, 512]) — the DualFC tuple.
    """
    B, C, H, W = x_nchw.shape
    # x = x.expand(-1, 3, -1, -1): the 3 channels are identical copies (requires C == 1), and
    # conv is linear in channels, so summing conv1's weights over Cin and running with Cin=1 is
    # mathematically identical — no 3x broadcast, stem K drops from 147 to 49.
    assert C == 1, "PretrainedModel.forward expands a single-channel input to 3 channels"
    x = jnp.transpose(x_nchw, (0, 2, 3, 1)).astype(jnp.bfloat16)  # NCHW -> NHWC, bf16
    w1 = jnp.sum(params["conv1_w"], axis=1, keepdims=True)        # [64,3,7,7] -> [64,1,7,7]

    # stem
    x = conv_bn(x, w1, params["bn1_s"], params["bn1_b"], 2, 3, relu=True)
    x = maxpool(x, 3, 2, 1)

    # residual stages
    for layer in ("layer1", "layer2", "layer3", "layer4"):
        for blk in params[layer]:
            x = basic_block(x, blk)

    # adaptive avgpool (1,1) + flatten + DualFC, fused in one small kernel.
    B_, H_, W_, C_ = x.shape
    feat_in = x.reshape(B_, H_ * W_, C_)
    num_classes = params["fc_w"].shape[0]
    ncp = _round_up(num_classes, 128)  # lane-dense padded logits slab, sliced afterwards
    w_fc = jnp.zeros((C_, ncp), jnp.float32).at[:, :num_classes].set(
        jnp.transpose(params["fc_w"]).astype(jnp.float32))
    b_fc = jnp.zeros((1, ncp), jnp.float32).at[:, :num_classes].set(
        params["fc_b"].astype(jnp.float32)[None, :])

    logits_p, feat = pl.pallas_call(
        functools.partial(_head_kernel, inv_hw=1.0 / float(H_ * W_)),
        out_shape=(
            jax.ShapeDtypeStruct((B_, ncp), jnp.float32),
            jax.ShapeDtypeStruct((B_, C_), jnp.float32),
        ),
        in_specs=[_VMEM, _VMEM, _VMEM],
        out_specs=(_VMEM, _VMEM),
    )(feat_in, w_fc, b_fc)
    return logits_p[:, :num_classes], feat


# ----------------------------------------------------------------------------
# Deterministic synthetic parameters (shapes follow torchvision resnet18)
# ----------------------------------------------------------------------------
def init_resnet18_dualfc_params(seed=0, num_classes=NUM_CLASSES):
    key = jax.random.PRNGKey(seed)

    def nk():
        nonlocal key
        key, sub = jax.random.split(key)
        return sub

    def conv_w(cout, cin, k):
        fan_in = cin * k * k
        return jax.random.normal(nk(), (cout, cin, k, k), jnp.float32) * jnp.sqrt(
            2.0 / fan_in
        )

    def bn(c):
        # eval-mode BatchNorm folded to per-channel scale/bias
        scale = 1.0 + 0.05 * jax.random.normal(nk(), (c,), jnp.float32)
        bias = 0.05 * jax.random.normal(nk(), (c,), jnp.float32)
        return scale, bias

    def block(cin, cout, stride):
        b = {"stride": stride}
        b["conv1_w"] = conv_w(cout, cin, 3)
        b["bn1_s"], b["bn1_b"] = bn(cout)
        b["conv2_w"] = conv_w(cout, cout, 3)
        b["bn2_s"], b["bn2_b"] = bn(cout)
        if stride != 1 or cin != cout:
            b["down_w"] = conv_w(cout, cin, 1)
            b["dbn_s"], b["dbn_b"] = bn(cout)
        return b

    p = {}
    p["conv1_w"] = conv_w(64, 3, 7)
    p["bn1_s"], p["bn1_b"] = bn(64)
    p["layer1"] = [block(64, 64, 1), block(64, 64, 1)]
    p["layer2"] = [block(64, 128, 2), block(128, 128, 1)]
    p["layer3"] = [block(128, 256, 2), block(256, 256, 1)]
    p["layer4"] = [block(256, 512, 2), block(512, 512, 1)]
    # DualFC.fc1: Linear(512, num_classes)   (PyTorch W is [out, in])
    p["fc_w"] = 0.05 * jax.random.normal(nk(), (num_classes, 512), jnp.float32)
    p["fc_b"] = jnp.zeros((num_classes,), jnp.float32)
    # TODO(synk): torchvision pretrained ImageNet weights cannot be loaded here; synthetic init.
    return p


if __name__ == "__main__":
    key = jax.random.PRNGKey(0)
    # Grayscale NCHW input, matching x.expand(-1, 3, -1, -1) semantics.
    x = jax.random.normal(key, (2, 1, 32, 32), dtype=jnp.float32)
    params = init_resnet18_dualfc_params(seed=0, num_classes=NUM_CLASSES)

    logits, feats = pretrained_model_forward(x, params)
    jax.block_until_ready((logits, feats))

    assert logits.shape == (2, NUM_CLASSES) and feats.shape == (2, 512)
    assert bool(jnp.all(jnp.isfinite(logits))) and bool(jnp.all(jnp.isfinite(feats)))
    print("KERNEL_OK")
</pallas_src>

<mosaic_0001>
module attributes {stable_mosaic.version = 11 : i64} {
  func.func @_conv_kernel(%arg0: i32, %arg1: i32, %arg2: i32, %arg3: memref<512x128xbf16, #tpu.memory_space<vmem>>, %arg4: memref<128x64xbf16, #tpu.memory_space<vmem>>, %arg5: memref<1x64xf32, #tpu.memory_space<vmem>>, %arg6: memref<512x64xbf16, #tpu.memory_space<vmem>>, %arg7: memref<512x64xf32, #tpu.memory_space<vmem>>) attributes {dimension_semantics = [#tpu.dimension_semantics<parallel>, #tpu.dimension_semantics<parallel>, #tpu.dimension_semantics<arbitrary>], iteration_bounds = array<i64: 1, 1, 1>, scalar_prefetch = 0 : i64, scratch_operands = 1 : i64, tpu.core_type = #tpu.core_type<tc>, window_params = [{transform_indices = @transform_0, window_bounds = array<i64: 512, 128>}, {transform_indices = @transform_1, window_bounds = array<i64: 128, 64>}, {transform_indices = @transform_2, window_bounds = array<i64: 1, 64>}, {transform_indices = @transform_3, window_bounds = array<i64: 512, 64>}]} {
    %c0_i32 = arith.constant 0 : i32
    %0 = arith.cmpi eq, %arg2, %c0_i32 : i32
    %1 = arith.extui %0 : i1 to i32
    %c0_i32_0 = arith.constant 0 : i32
    %2 = arith.cmpi ne, %1, %c0_i32_0 : i32
    scf.if %2 {
      %cst_10 = arith.constant 0.000000e+00 : f32
      %12 = vector.broadcast %cst_10 : f32 to vector<512x64xf32>
      %c0_11 = arith.constant 0 : index
      %c0_12 = arith.constant 0 : index
      %13 = vector.load %arg7[%c0_11, %c0_12] : memref<512x64xf32, #tpu.memory_space<vmem>>, vector<512x64xf32>
      tpu.vector_store %arg7[%c0_11, %c0_12], %12 {strides = array<i32>} : memref<512x64xf32, #tpu.memory_space<vmem>>, vector<512x64xf32>,
    } else {
    }
    %c0 = arith.constant 0 : index
    %c0_1 = arith.constant 0 : index
    %3 = vector.load %arg7[%c0, %c0_1] : memref<512x64xf32, #tpu.memory_space<vmem>>, vector<512x64xf32>
    %c0_2 = arith.constant 0 : index
    %c0_3 = arith.constant 0 : index
    %4 = vector.load %arg3[%c0_2, %c0_3] : memref<512x128xbf16, #tpu.memory_space<vmem>>, vector<512x128xbf16>
    %c0_4 = arith.constant 0 : index
    %c0_5 = arith.constant 0 : index
    %5 = vector.load %arg4[%c0_4, %c0_5] : memref<128x64xbf16, #tpu.memory_space<vmem>>, vector<128x64xbf16>
    %cst = arith.constant dense<0.000000e+00> : vector<512x64xf32>
    %6 = tpu.matmul %4, %5, %cst {dimension_numbers = #tpu.dot_dimension_numbers<[1], [0], [0], [1], [0, 0, 1, 1], [], []>} : vector<512x128xbf16>, vector<128x64xbf16>, vector<512x64xf32> -> vector<512x64xf32>
    %7 = arith.addf %3, %6 : vector<512x64xf32>
    %c0_6 = arith.constant 0 : index
    %c0_7 = arith.constant 0 : index
    %8 = vector.load %arg7[%c0_6, %c0_7] : memref<512x64xf32, #tpu.memory_space<vmem>>, vector<512x64xf32>
    tpu.vector_store %arg7[%c0_6, %c0_7], %7 {strides = array<i32>} : memref<512x64xf32, #tpu.memory_space<vmem>>, vector<512x64xf32>,
    %c0_i32_8 = arith.constant 0 : i32
    %9 = arith.cmpi eq, %arg2, %c0_i32_8 : i32
    %10 = arith.extui %9 : i1 to i32
    %c0_i32_9 = arith.constant 0 : i32
    %11 = arith.cmpi ne, %10, %c0_i32_9 : i32
    scf.if %11 {
      %c0_10 = arith.constant 0 : index
      %c0_11 = arith.constant 0 : index
      %12 = vector.load %arg7[%c0_10, %c0_11] : memref<512x64xf32, #tpu.memory_space<vmem>>, vector<512x64xf32>
      %c0_12 = arith.constant 0 : index
      %c0_13 = arith.constant 0 : index
      %13 = vector.load %arg5[%c0_12, %c0_13] : memref<1x64xf32, #tpu.memory_space<vmem>>, vector<1x64xf32>
      %14 = vector.broadcast %13 : vector<1x64xf32> to vector<512x64xf32>
      %15 = arith.addf %12, %14 : vector<512x64xf32>
      %cst_14 = arith.constant 0.000000e+00 : f32
      %16 = vector.broadcast %cst_14 : f32 to vector<512x64xf32>
      %17 = arith.maximumf %15, %16 : vector<512x64xf32>
      %18 = arith.truncf %17 : vector<512x64xf32> to vector<512x64xbf16>
      %c0_15 = arith.constant 0 : index
      %c0_16 = arith.constant 0 : index
      %19 = vector.load %arg6[%c0_15, %c0_16] : memref<512x64xbf16, #tpu.memory_space<vmem>>, vector<512x64xbf16>
      tpu.vector_store %arg6[%c0_15, %c0_16], %18 {strides = array<i32>} : memref<512x64xbf16, #tpu.memory_space<vmem>>, vector<512x64xbf16>,
    } else {
    }
    return
  }
  func.func @transform_0(%arg0: i32, %arg1: i32, %arg2: i32) -> (i32, i32) {
    %c0_i32 = arith.constant 0 : i32
    return %arg0, %arg2 : i32, i32
  }
  func.func @transform_1(%arg0: i32, %arg1: i32, %arg2: i32) -> (i32, i32) {
    %c0_i32 = arith.constant 0 : i32
    return %arg2, %arg1 : i32, i32
  }
  func.func @transform_2(%arg0: i32, %arg1: i32, %arg2: i32) -> (i32, i32) {
    %c0_i32 = arith.constant 0 : i32
    %c0_i32_0 = arith.constant 0 : i32
    return %c0_i32, %arg1 : i32, i32
  }
  func.func @transform_3(%arg0: i32, %arg1: i32, %arg2: i32) -> (i32, i32) {
    %c0_i32 = arith.constant 0 : i32
    return %arg0, %arg1 : i32, i32
  }
}

</mosaic_0001>

<llo_original>
// kernel: tpu_custom_call.1
$region0: #{tpu_custom_call.1}
  #allocation0 [shape = 'u32[]', space=smem, size = 0x4, offset = 0x4, fixed_abs, tag = 'smem constant byte address 0x4 - core index']
  #allocation1 [shape = 'u32[144,128]{1,0:T(1,128)}', space=vmem, size = 0x12000, scoped, tag = 'internal scratch']
  #allocation2 [shape = 'f32[512,64]{1,0:T(8,128)}', space=vmem, size = 0x40000, scoped, tag = 'scratch operand']
  %s0 = inlined_call_operand.hbm [shape: bf16[512,128], index: 0, kind: input, shape index: {}]
  %s1 = inlined_call_operand.vmem [shape: bf16[128,64], index: 1, kind: input, shape index: {}]
  %s2 = inlined_call_operand.vmem [shape: f32[1,64], index: 2, kind: input, shape index: {}]
  %s3 = inlined_call_operand.vmem [shape: bf16[512,64], index: 3, kind: output, shape index: {}]
  %s4 = sld [smem:[#allocation0]]
  $region34: #{tpu_custom_call.1} parent=0
    _
  %s6 = ssub.s32 1, %s4
  %s7 = scalar_select 0, %s6, %s4
  $region1: #{tpu_custom_call.1} parent=0
    #allocation3 [shape = 'u8[131072]{0}', space=vmem, size = 0x20000, scoped, tag = 'input window, operand 0, single buffered']
    #allocation4 [shape = 's32[1]{0}', space=sflag, size = 0x4, scoped, tag = 'scoped memory for tpu_custom_call.1']
    %8 = vsyncpa [#allocation4], 0
    // Predicated region
    $region2: #{tpu_custom_call.1} parent=1 // pred_check
      _
    $region3: #{tpu_custom_call.1} parent=1 // pred_check_branch
      %10 = sbr.rel (0) target = $region5
    $region4: #{tpu_custom_call.1} parent=1 // pred_region
      %s12 = ssub.s32 4096, 4096
      %13 = vsyncadd [#allocation4], %s12
      %s14 = sshll.u32 [#allocation3], 4
      %s15 = int_to_ptr.vmem [resolvable:$true] %s14
      %20 = dma.hbm_to_vmem [thread:$0]  %s0, 4096, %s15, [#allocation4], 64, 64, 4
    $region5: #{tpu_custom_call.1} parent=1 // pred_fallthru
      _
    // Predicated region
    $region6: #{tpu_custom_call.1} parent=1 // pred_check
      _
    $region7: #{tpu_custom_call.1} parent=1 // pred_check_branch
      %22 = sbr.rel (0) target = $region9
    $region8: #{tpu_custom_call.1} parent=1 // pred_region
      _
    $region9: #{tpu_custom_call.1} parent=1 // pred_fallthru
      _
    // Predicated region
    $region10: #{tpu_custom_call.1} parent=1 // pred_check
      _
    $region11: #{tpu_custom_call.1} parent=1 // pred_check_branch
      %24 = sbr.rel (0) target = $region13
    $region12: #{tpu_custom_call.1} parent=1 // pred_region
      _
    $region13: #{tpu_custom_call.1} parent=1 // pred_fallthru
      _
    // Predicated region
    $region14: #{tpu_custom_call.1} parent=1 // pred_check
      _
    $region15: #{tpu_custom_call.1} parent=1 // pred_check_branch
      %26 = sbr.rel (0) target = $region17
    $region16: #{tpu_custom_call.1} parent=1 // pred_region
      %27 = dma.done [#allocation4], 4096
    $region17: #{tpu_custom_call.1} parent=1 // pred_fallthru
      _
    %p29 = scmp.eq.s32.totalorder 0, 0
    // Predicated region
    $region18: #{tpu_custom_call.1} parent=1 // pred_check
      %p30 = pneg %p29
    $region19: #{tpu_custom_call.1} parent=1 // pred_check_branch
      %32 = sbr.rel (%p30) target = $region21
    $region20: #{tpu_custom_call.1} parent=1 // pred_region
      %vm33 = vcmask 523264
      %34 = vst.msk [vmem:[#allocation2] sm:$0xff] %vm33, 0.0
      %35 = vst.msk [vmem:[#allocation2 + $0x8] sm:$0xff] %vm33, 0.0
      %36 = vst.msk [vmem:[#allocation2 + $0x10] sm:$0xff] %vm33, 0.0
      %37 = vst.msk [vmem:[#allocation2 + $0x18] sm:$0xff] %vm33, 0.0
      %38 = vst.msk [vmem:[#allocation2 + $0x20] sm:$0xff] %vm33, 0.0
      %39 = vst.msk [vmem:[#allocation2 + $0x28] sm:$0xff] %vm33, 0.0
      %40 = vst.msk [vmem:[#allocation2 + $0x30] sm:$0xff] %vm33, 0.0
      %41 = vst.msk [vmem:[#allocation2 + $0x38] sm:$0xff] %vm33, 0.0
      %42 = vst.msk [vmem:[#allocation2 + $0x40] sm:$0xff] %vm33, 0.0
      %43 = vst.msk [vmem:[#allocation2 + $0x48] sm:$0xff] %vm33, 0.0
      %44 = vst.msk [vmem:[#allocation2 + $0x50] sm:$0xff] %vm33, 0.0
      %45 = vst.msk [vmem:[#allocation2 + $0x58] sm:$0xff] %vm33, 0.0
      %46 = vst.msk [vmem:[#allocation2 + $0x60] sm:$0xff] %vm33, 0.0
      %47 = vst.msk [vmem:[#allocation2 + $0x68] sm:$0xff] %vm33, 0.0
      %48 = vst.msk [vmem:[#allocation2 + $0x70] sm:$0xff] %vm33, 0.0
      %49 = vst.msk [vmem:[#allocation2 + $0x78] sm:$0xff] %vm33, 0.0
      %50 = vst.msk [vmem:[#allocation2 + $0x80] sm:$0xff] %vm33, 0.0
      %51 = vst.msk [vmem:[#allocation2 + $0x88] sm:$0xff] %vm33, 0.0
      %52 = vst.msk [vmem:[#allocation2 + $0x90] sm:$0xff] %vm33, 0.0
      %53 = vst.msk [vmem:[#allocation2 + $0x98] sm:$0xff] %vm33, 0.0
      %54 = vst.msk [vmem:[#allocation2 + $0xa0] sm:$0xff] %vm33, 0.0
      %55 = vst.msk [vmem:[#allocation2 + $0xa8] sm:$0xff] %vm33, 0.0
      %56 = vst.msk [vmem:[#allocation2 + $0xb0] sm:$0xff] %vm33, 0.0
      %57 = vst.msk [vmem:[#allocation2 + $0xb8] sm:$0xff] %vm33, 0.0
      %58 = vst.msk [vmem:[#allocation2 + $0xc0] sm:$0xff] %vm33, 0.0
      %59 = vst.msk [vmem:[#allocation2 + $0xc8] sm:$0xff] %vm33, 0.0
      %60 = vst.msk [vmem:[#allocation2 + $0xd0] sm:$0xff] %vm33, 0.0
      %61 = vst.msk [vmem:[#allocation2 + $0xd8] sm:$0xff] %vm33, 0.0
      %62 = vst.msk [vmem:[#allocation2 + $0xe0] sm:$0xff] %vm33, 0.0
      %63 = vst.msk [vmem:[#allocation2 + $0xe8] sm:$0xff] %vm33, 0.0
      %64 = vst.msk [vmem:[#allocation2 + $0xf0] sm:$0xff] %vm33, 0.0
      %65 = vst.msk [vmem:[#allocation2 + $0xf8] sm:$0xff] %vm33, 0.0
      %66 = vst.msk [vmem:[#allocation2 + $0x100] sm:$0xff] %vm33, 0.0
      %67 = vst.msk [vmem:[#allocation2 + $0x108] sm:$0xff] %vm33, 0.0
      %68 = vst.msk [vmem:[#allocation2 + $0x110] sm:$0xff] %vm33, 0.0
      %69 = vst.msk [vmem:[#allocation2 + $0x118] sm:$0xff] %vm33, 0.0
      %70 = vst.msk [vmem:[#allocation2 + $0x120] sm:$0xff] %vm33, 0.0
      %71 = vst.msk [vmem:[#allocation2 + $0x128] sm:$0xff] %vm33, 0.0
      %72 = vst.msk [vmem:[#allocation2 + $0x130] sm:$0xff] %vm33, 0.0
      %73 = vst.msk [vmem:[#allocation2 + $0x138] sm:$0xff] %vm33, 0.0
      %74 = vst.msk [vmem:[#allocation2 + $0x140] sm:$0xff] %vm33, 0.0
      %75 = vst.msk [vmem:[#allocation2 + $0x148] sm:$0xff] %vm33, 0.0
      %76 = vst.msk [vmem:[#allocation2 + $0x150] sm:$0xff] %vm33, 0.0
      %77 = vst.msk [vmem:[#allocation2 + $0x158] sm:$0xff] %vm33, 0.0
      %78 = vst.msk [vmem:[#allocation2 + $0x160] sm:$0xff] %vm33, 0.0
      %79 = vst.msk [vmem:[#allocation2 + $0x168] sm:$0xff] %vm33, 0.0
      %80 = vst.msk [vmem:[#allocation2 + $0x170] sm:$0xff] %vm33, 0.0
      %81 = vst.msk [vmem:[#allocation2 + $0x178] sm:$0xff] %vm33, 0.0
      %82 = vst.msk [vmem:[#allocation2 + $0x180] sm:$0xff] %vm33, 0.0
      %83 = vst.msk [vmem:[#allocation2 + $0x188] sm:$0xff] %vm33, 0.0
      %84 = vst.msk [vmem:[#allocation2 + $0x190] sm:$0xff] %vm33, 0.0
      %85 = vst.msk [vmem:[#allocation2 + $0x198] sm:$0xff] %vm33, 0.0
      %86 = vst.msk [vmem:[#allocation2 + $0x1a0] sm:$0xff] %vm33, 0.0
      %87 = vst.msk [vmem:[#allocation2 + $0x1a8] sm:$0xff] %vm33, 0.0
      %88 = vst.msk [vmem:[#allocation2 + $0x1b0] sm:$0xff] %vm33, 0.0
      %89 = vst.msk [vmem:[#allocation2 + $0x1b8] sm:$0xff] %vm33, 0.0
      %90 = vst.msk [vmem:[#allocation2 + $0x1c0] sm:$0xff] %vm33, 0.0
      %91 = vst.msk [vmem:[#allocation2 + $0x1c8] sm:$0xff] %vm33, 0.0
      %92 = vst.msk [vmem:[#allocation2 + $0x1d0] sm:$0xff] %vm33, 0.0
      %93 = vst.msk [vmem:[#allocation2 + $0x1d8] sm:$0xff] %vm33, 0.0
      %94 = vst.msk [vmem:[#allocation2 + $0x1e0] sm:$0xff] %vm33, 0.0
      %95 = vst.msk [vmem:[#allocation2 + $0x1e8] sm:$0xff] %vm33, 0.0
      %96 = vst.msk [vmem:[#allocation2 + $0x1f0] sm:$0xff] %vm33, 0.0
      %97 = vst.msk [vmem:[#allocation2 + $0x1f8] sm:$0xff] %vm33, 0.0
    $region21: #{tpu_custom_call.1} parent=1 // pred_fallthru
      _
    %v98 = vld [vmem:[#allocation2] sm:$0xff]
    %v99 = vld [vmem:[#allocation2 + $0x8] sm:$0xff]
    %v100 = vld [vmem:[#allocation2 + $0x10] sm:$0xff]
    %v101 = vld [vmem:[#allocation2 + $0x18] sm:$0xff]
    %v102 = vld [vmem:[#allocation2 + $0x20] sm:$0xff]
    %v103 = vld [vmem:[#allocation2 + $0x28] sm:$0xff]
    %v104 = vld [vmem:[#allocation2 + $0x30] sm:$0xff]
    %v105 = vld [vmem:[#allocation2 + $0x38] sm:$0xff]
    %v106 = vld [vmem:[#allocation2 + $0x40] sm:$0xff]
    %v107 = vld [vmem:[#allocation2 + $0x48] sm:$0xff]
    %v108 = vld [vmem:[#allocation2 + $0x50] sm:$0xff]
    %v109 = vld [vmem:[#allocation2 + $0x58] sm:$0xff]
    %v110 = vld [vmem:[#allocation2 + $0x60] sm:$0xff]
    %v111 = vld [vmem:[#allocation2 + $0x68] sm:$0xff]
    %v112 = vld [vmem:[#allocation2 + $0x70] sm:$0xff]
    %v113 = vld [vmem:[#allocation2 + $0x78] sm:$0xff]
    %v114 = vld [vmem:[#allocation2 + $0x80] sm:$0xff]
    %v115 = vld [vmem:[#allocation2 + $0x88] sm:$0xff]
    %v116 = vld [vmem:[#allocation2 + $0x90] sm:$0xff]
    %v117 = vld [vmem:[#allocation2 + $0x98] sm:$0xff]
    %v118 = vld [vmem:[#allocation2 + $0xa0] sm:$0xff]
    %v119 = vld [vmem:[#allocation2 + $0xa8] sm:$0xff]
    %v120 = vld [vmem:[#allocation2 + $0xb0] sm:$0xff]
    %v121 = vld [vmem:[#allocation2 + $0xb8] sm:$0xff]
    %v122 = vld [vmem:[#allocation2 + $0xc0] sm:$0xff]
    %v123 = vld [vmem:[#allocation2 + $0xc8] sm:$0xff]
    %v124 = vld [vmem:[#allocation2 + $0xd0] sm:$0xff]
    %v125 = vld [vmem:[#allocation2 + $0xd8] sm:$0xff]
    %v126 = vld [vmem:[#allocation2 + $0xe0] sm:$0xff]
    %v127 = vld [vmem:[#allocation2 + $0xe8] sm:$0xff]
    %v128 = vld [vmem:[#allocation2 + $0xf0] sm:$0xff]
    %v129 = vld [vmem:[#allocation2 + $0xf8] sm:$0xff]
    %v130 = vld [vmem:[#allocation2 + $0x100] sm:$0xff]
    %v131 = vld [vmem:[#allocation2 + $0x108] sm:$0xff]
    %v132 = vld [vmem:[#allocation2 + $0x110] sm:$0xff]
    %v133 = vld [vmem:[#allocation2 + $0x118] sm:$0xff]
    %v134 = vld [vmem:[#allocation2 + $0x120] sm:$0xff]
    %v135 = vld [vmem:[#allocation2 + $0x128] sm:$0xff]
    %v136 = vld [vmem:[#allocation2 + $0x130] sm:$0xff]
    %v137 = vld [vmem:[#allocation2 + $0x138] sm:$0xff]
    %v138 = vld [vmem:[#allocation2 + $0x140] sm:$0xff]
    %v139 = vld [vmem:[#allocation2 + $0x148] sm:$0xff]
    %v140 = vld [vmem:[#allocation2 + $0x150] sm:$0xff]
    %v141 = vld [vmem:[#allocation2 + $0x158] sm:$0xff]
    %v142 = vld [vmem:[#allocation2 + $0x160] sm:$0xff]
    %v143 = vld [vmem:[#allocation2 + $0x168] sm:$0xff]
    %v144 = vld [vmem:[#allocation2 + $0x170] sm:$0xff]
    %v145 = vld [vmem:[#allocation2 + $0x178] sm:$0xff]
    %v146 = vld [vmem:[#allocation2 + $0x180] sm:$0xff]
    %v147 = vld [vmem:[#allocation2 + $0x188] sm:$0xff]
    %v148 = vld [vmem:[#allocation2 + $0x190] sm:$0xff]
    %v149 = vld [vmem:[#allocation2 + $0x198] sm:$0xff]
    %v150 = vld [vmem:[#allocation2 + $0x1a0] sm:$0xff]
    %v151 = vld [vmem:[#allocation2 + $0x1a8] sm:$0xff]
    %v152 = vld [vmem:[#allocation2 + $0x1b0] sm:$0xff]
    %v153 = vld [vmem:[#allocation2 + $0x1b8] sm:$0xff]
    %v154 = vld [vmem:[#allocation2 + $0x1c0] sm:$0xff]
    %v155 = vld [vmem:[#allocation2 + $0x1c8] sm:$0xff]
    %v156 = vld [vmem:[#allocation2 + $0x1d0] sm:$0xff]
    %v157 = vld [vmem:[#allocation2 + $0x1d8] sm:$0xff]
    %v158 = vld [vmem:[#allocation2 + $0x1e0] sm:$0xff]
    %v159 = vld [vmem:[#allocation2 + $0x1e8] sm:$0xff]
    %v160 = vld [vmem:[#allocation2 + $0x1f0] sm:$0xff]
    %v161 = vld [vmem:[#allocation2 + $0x1f8] sm:$0xff]
    %v162 = vld [vmem:[#allocation3] sm:$0xf]
    %v163 = vld [vmem:[#allocation3 + $0x4] sm:$0xf]
    %v164 = vld [vmem:[#allocation3 + $0x8] sm:$0xf]
    %v165 = vld [vmem:[#allocation3 + $0xc] sm:$0xf]
    %v166 = vld [vmem:[#allocation3 + $0x10] sm:$0xf]
    %v167 = vld [vmem:[#allocation3 + $0x14] sm:$0xf]
    %v168 = vld [vmem:[#allocation3 + $0x18] sm:$0xf]
    %v169 = vld [vmem:[#allocation3 + $0x1c] sm:$0xf]
    %v170 = vld [vmem:[#allocation3 + $0x20] sm:$0xf]
    %v171 = vld [vmem:[#allocation3 + $0x24] sm:$0xf]
    %v172 = vld [vmem:[#allocation3 + $0x28] sm:$0xf]
    %v173 = vld [vmem:[#allocation3 + $0x2c] sm:$0xf]
    %v174 = vld [vmem:[#allocation3 + $0x30] sm:$0xf]
    %v175 = vld [vmem:[#allocation3 + $0x34] sm:$0xf]
    %v176 = vld [vmem:[#allocation3 + $0x38] sm:$0xf]
    %v177 = vld [vmem:[#allocation3 + $0x3c] sm:$0xf]
    %v178 = vld [vmem:[#allocation3 + $0x40] sm:$0xf]
    %v179 = vld [vmem:[#allocation3 + $0x44] sm:$0xf]
    %v180 = vld [vmem:[#allocation3 + $0x48] sm:$0xf]
    %v181 = vld [vmem:[#allocation3 + $0x4c] sm:$0xf]
    %v182 = vld [vmem:[#allocation3 + $0x50] sm:$0xf]
    %v183 = vld [vmem:[#allocation3 + $0x54] sm:$0xf]
    %v184 = vld [vmem:[#allocation3 + $0x58] sm:$0xf]
    %v185 = vld [vmem:[#allocation3 + $0x5c] sm:$0xf]
    %v186 = vld [vmem:[#allocation3 + $0x60] sm:$0xf]
    %v187 = vld [vmem:[#allocation3 + $0x64] sm:$0xf]
    %v188 = vld [vmem:[#allocation3 + $0x68] sm:$0xf]
    %v189 = vld [vmem:[#allocation3 + $0x6c] sm:$0xf]
    %v190 = vld [vmem:[#allocation3 + $0x70] sm:$0xf]
    %v191 = vld [vmem:[#allocation3 + $0x74] sm:$0xf]
    %v192 = vld [vmem:[#allocation3 + $0x78] sm:$0xf]
    %v193 = vld [vmem:[#allocation3 + $0x7c] sm:$0xf]
    %v194 = vld [vmem:[#allocation3 + $0x80] sm:$0xf]
    %v195 = vld [vmem:[#allocation3 + $0x84] sm:$0xf]
    %v196 = vld [vmem:[#allocation3 + $0x88] sm:$0xf]
    %v197 = vld [vmem:[#allocation3 + $0x8c] sm:$0xf]
    %v198 = vld [vmem:[#allocation3 + $0x90] sm:$0xf]
    %v199 = vld [vmem:[#allocation3 + $0x94] sm:$0xf]
    %v200 = vld [vmem:[#allocation3 + $0x98] sm:$0xf]
    %v201 = vld [vmem:[#allocation3 + $0x9c] sm:$0xf]
    %v202 = vld [vmem:[#allocation3 + $0xa0] sm:$0xf]
    %v203 = vld [vmem:[#allocation3 + $0xa4] sm:$0xf]
    %v204 = vld [vmem:[#allocation3 + $0xa8] sm:$0xf]
    %v205 = vld [vmem:[#allocation3 + $0xac] sm:$0xf]
    %v206 = vld [vmem:[#allocation3 + $0xb0] sm:$0xf]
    %v207 = vld [vmem:[#allocation3 + $0xb4] sm:$0xf]
    %v208 = vld [vmem:[#allocation3 + $0xb8] sm:$0xf]
    %v209 = vld [vmem:[#allocation3 + $0xbc] sm:$0xf]
    %v210 = vld [vmem:[#allocation3 + $0xc0] sm:$0xf]
    %v211 = vld [vmem:[#allocation3 + $0xc4] sm:$0xf]
    %v212 = vld [vmem:[#allocation3 + $0xc8] sm:$0xf]
    %v213 = vld [vmem:[#allocation3 + $0xcc] sm:$0xf]
    %v214 = vld [vmem:[#allocation3 + $0xd0] sm:$0xf]
    %v215 = vld [vmem:[#allocation3 + $0xd4] sm:$0xf]
    %v216 = vld [vmem:[#allocation3 + $0xd8] sm:$0xf]
    %v217 = vld [vmem:[#allocation3 + $0xdc] sm:$0xf]
    %v218 = vld [vmem:[#allocation3 + $0xe0] sm:$0xf]
    %v219 = vld [vmem:[#allocation3 + $0xe4] sm:$0xf]
    %v220 = vld [vmem:[#allocation3 + $0xe8] sm:$0xf]
    %v221 = vld [vmem:[#allocation3 + $0xec] sm:$0xf]
    %v222 = vld [vmem:[#allocation3 + $0xf0] sm:$0xf]
    %v223 = vld [vmem:[#allocation3 + $0xf4] sm:$0xf]
    %v224 = vld [vmem:[#allocation3 + $0xf8] sm:$0xf]
    %v225 = vld [vmem:[#allocation3 + $0xfc] sm:$0xf]
    %v226 = vld [vmem:[%s1] sm:$0xf]
    %v227 = vld [vmem:[%s1 + $0x4] sm:$0xf]
    %v228 = vld [vmem:[%s1 + $0x8] sm:$0xf]
    %v229 = vld [vmem:[%s1 + $0xc] sm:$0xf]
    %v230 = vld [vmem:[%s1 + $0x10] sm:$0xf]
    %v231 = vld [vmem:[%s1 + $0x14] sm:$0xf]
    %v232 = vld [vmem:[%s1 + $0x18] sm:$0xf]
    %v233 = vld [vmem:[%s1 + $0x1c] sm:$0xf]
    %v234 = vld [vmem:[%s1 + $0x20] sm:$0xf]
    %v235 = vld [vmem:[%s1 + $0x24] sm:$0xf]
    %v236 = vld [vmem:[%s1 + $0x28] sm:$0xf]
    %v237 = vld [vmem:[%s1 + $0x2c] sm:$0xf]
    %v238 = vld [vmem:[%s1 + $0x30] sm:$0xf]
    %v239 = vld [vmem:[%s1 + $0x34] sm:$0xf]
    %v240 = vld [vmem:[%s1 + $0x38] sm:$0xf]
    %v241 = vld [vmem:[%s1 + $0x3c] sm:$0xf]
    %v306 = vunpack.c.l.b16 %v162
    %v307 = vunpack.c.l.b16 %v163
    %v308 = vunpack.c.l.b16 %v164
    %v309 = vunpack.c.l.b16 %v165
    %v310 = vunpack.c.l.b16 %v166
    %v311 = vunpack.c.l.b16 %v167
    %v312 = vunpack.c.l.b16 %v168
    %v313 = vunpack.c.l.b16 %v169
    %v314 = vunpack.c.l.b16 %v170
    %v315 = vunpack.c.l.b16 %v171
    %v316 = vunpack.c.l.b16 %v172
    %v317 = vunpack.c.l.b16 %v173
    %v318 = vunpack.c.l.b16 %v174
    %v319 = vunpack.c.l.b16 %v175
    %v320 = vunpack.c.l.b16 %v176
    %v321 = vunpack.c.l.b16 %v177
    %v322 = vunpack.c.l.b16 %v178
    %v323 = vunpack.c.l.b16 %v179
    %v324 = vunpack.c.l.b16 %v180
    %v325 = vunpack.c.l.b16 %v181
    %v326 = vunpack.c.l.b16 %v182
    %v327 = vunpack.c.l.b16 %v183
    %v328 = vunpack.c.l.b16 %v184
    %v329 = vunpack.c.l.b16 %v185
    %v330 = vunpack.c.l.b16 %v186
    %v331 = vunpack.c.l.b16 %v187
    %v332 = vunpack.c.l.b16 %v188
    %v333 = vunpack.c.l.b16 %v189
    %v334 = vunpack.c.l.b16 %v190
    %v335 = vunpack.c.l.b16 %v191
    %v336 = vunpack.c.l.b16 %v192
    %v337 = vunpack.c.l.b16 %v193
    %v338 = vunpack.c.l.b16 %v194
    %v339 = vunpack.c.l.b16 %v195
    %v340 = vunpack.c.l.b16 %v196
    %v341 = vunpack.c.l.b16 %v197
    %v342 = vunpack.c.l.b16 %v198
    %v343 = vunpack.c.l.b16 %v199
    %v344 = vunpack.c.l.b16 %v200
    %v345 = vunpack.c.l.b16 %v201
    %v346 = vunpack.c.l.b16 %v202
    %v347 = vunpack.c.l.b16 %v203
    %v348 = vunpack.c.l.b16 %v204
    %v349 = vunpack.c.l.b16 %v205
    %v350 = vunpack.c.l.b16 %v206
    %v351 = vunpack.c.l.b16 %v207
    %v352 = vunpack.c.l.b16 %v208
    %v353 = vunpack.c.l.b16 %v209
    %v354 = vunpack.c.l.b16 %v210
    %v355 = vunpack.c.l.b16 %v211
    %v356 = vunpack.c.l.b16 %v212
    %v357 = vunpack.c.l.b16 %v213
    %v358 = vunpack.c.l.b16 %v214
    %v359 = vunpack.c.l.b16 %v215
    %v360 = vunpack.c.l.b16 %v216
    %v361 = vunpack.c.l.b16 %v217
    %v362 = vunpack.c.l.b16 %v218
    %v363 = vunpack.c.l.b16 %v219
    %v364 = vunpack.c.l.b16 %v220
    %v365 = vunpack.c.l.b16 %v221
    %v366 = vunpack.c.l.b16 %v222
    %v367 = vunpack.c.l.b16 %v223
    %v368 = vunpack.c.l.b16 %v224
    %v369 = vunpack.c.l.b16 %v225
    %v370 = vpack.c.b16 %v307, %v306
    %v371 = vpack.c.b16 %v309, %v308
    %v372 = vpack.c.b16 %v311, %v310
    %v373 = vpack.c.b16 %v313, %v312
    %v374 = vpack.c.b16 %v315, %v314
    %v375 = vpack.c.b16 %v317, %v316
    %v376 = vpack.c.b16 %v319, %v318
    %v377 = vpack.c.b16 %v321, %v320
    %v378 = vpack.c.b16 %v323, %v322
    %v379 = vpack.c.b16 %v325, %v324
    %v380 = vpack.c.b16 %v327, %v326
    %v381 = vpack.c.b16 %v329, %v328
    %v382 = vpack.c.b16 %v331, %v330
    %v383 = vpack.c.b16 %v333, %v332
    %v384 = vpack.c.b16 %v335, %v334
    %v385 = vpack.c.b16 %v337, %v336
    %v386 = vpack.c.b16 %v339, %v338
    %v387 = vpack.c.b16 %v341, %v340
    %v388 = vpack.c.b16 %v343, %v342
    %v389 = vpack.c.b16 %v345, %v344
    %v390 = vpack.c.b16 %v347, %v346
    %v391 = vpack.c.b16 %v349, %v348
    %v392 = vpack.c.b16 %v351, %v350
    %v393 = vpack.c.b16 %v353, %v352
    %v394 = vpack.c.b16 %v355, %v354
    %v395 = vpack.c.b16 %v357, %v356
    %v396 = vpack.c.b16 %v359, %v358
    %v397 = vpack.c.b16 %v361, %v360
    %v398 = vpack.c.b16 %v363, %v362
    %v399 = vpack.c.b16 %v365, %v364
    %v400 = vpack.c.b16 %v367, %v366
    %v401 = vpack.c.b16 %v369, %v368
    %v450 = vunpack.c.l.b16 %v226
    %v451 = vunpack.c.l.b16 %v227
    %v452 = vunpack.c.l.b16 %v228
    %v453 = vunpack.c.l.b16 %v229
    %v454 = vunpack.c.l.b16 %v230
    %v455 = vunpack.c.l.b16 %v231
    %v456 = vunpack.c.l.b16 %v232
    %v457 = vunpack.c.l.b16 %v233
    %v458 = vunpack.c.l.b16 %v234
    %v459 = vunpack.c.l.b16 %v235
    %v460 = vunpack.c.l.b16 %v236
    %v461 = vunpack.c.l.b16 %v237
    %v462 = vunpack.c.l.b16 %v238
    %v463 = vunpack.c.l.b16 %v239
    %v464 = vunpack.c.l.b16 %v240
    %v465 = vunpack.c.l.b16 %v241
    %v466 = vpack.c.b16 %v451, %v450
    %v467 = vpack.c.b16 %v453, %v452
    %v468 = vpack.c.b16 %v455, %v454
    %v469 = vpack.c.b16 %v457, %v456
    %v470 = vpack.c.b16 %v459, %v458
    %v471 = vpack.c.b16 %v461, %v460
    %v472 = vpack.c.b16 %v463, %v462
    %v473 = vpack.c.b16 %v465, %v464
    %482 = vmatprep.subr.bf16.mxu0 0
    %483 = vmatpush1.bf16.msra.mxu0 %v473
    %484 = vmatprep.subr.bf16.mxu0 0
    %485 = vmatpush1.bf16.msra.mxu0 %v472
    %486 = vmatprep.subr.bf16.mxu0 0
    %487 = vmatpush1.bf16.msra.mxu0 %v471
    %488 = vmatprep.subr.bf16.mxu0 0
    %489 = vmatpush1.bf16.msra.mxu0 %v470
    %490 = vmatprep.subr.bf16.mxu0 0
    %491 = vmatpush1.bf16.msra.mxu0 %v469
    %492 = vmatprep.subr.bf16.mxu0 0
    %493 = vmatpush1.bf16.msra.mxu0 %v468
    %494 = vmatprep.subr.bf16.mxu0 0
    %495 = vmatpush1.bf16.msra.mxu0 %v467
    %496 = vmatprep.subr.bf16.mxu0 0
    %497 = vmatpush1.bf16.msra.mxu0 %v466
    %498 = vmatprep.subr.bf16.mxu0 0
    %499 = vmatpush2.bf16.msra.mxu0 0
    %500 = vmatprep.subr.bf16.mxu0 0
    %501 = vmatpush2.bf16.msra.mxu0 0
    %502 = vmatprep.subr.bf16.mxu0 0
    %503 = vmatpush2.bf16.msra.mxu0 0
    %504 = vmatprep.subr.bf16.mxu0 0
    %505 = vmatpush2.bf16.msra.mxu0 0
    %506 = vmatprep.subr.bf16.mxu0 0
    %507 = vmatpush2.bf16.msra.mxu0 0
    %508 = vmatprep.subr.bf16.mxu0 0
    %509 = vmatpush2.bf16.msra.mxu0 0
    %510 = vmatprep.subr.bf16.mxu0 0
    %511 = vmatpush2.bf16.msra.mxu0 0
    %512 = vmatprep.subr.bf16.mxu0 0
    %513 = vmatpush2.bf16.msra.mxu0 0
    %514 = vmatprep.mubr.bf16.mxu0 0
    %515 = vmatmul.mubr.bf16.gmra.mxu0 %v370
    %v516 = vpop.f32.mrf.mxu0
    %v517 = vadd.f32 0.0, %v516
    %v518 = vpop.f32.mrf.mxu0
    %v519 = vpop.f32.mrf.mxu0
    %v520 = vadd.f32 0.0, %v519
    %v521 = vpop.f32.mrf.mxu0
    %522 = vmatprep.mubr.bf16.mxu0 0
    %523 = vmatmul.mubr.bf16.gmra.mxu0 %v371
    %v524 = vpop.f32.mrf.mxu0
    %v525 = vadd.f32 0.0, %v524
    %v526 = vpop.f32.mrf.mxu0
    %v527 = vpop.f32.mrf.mxu0
    %v528 = vadd.f32 0.0, %v527
    %v529 = vpop.f32.mrf.mxu0
    %530 = vmatprep.mubr.bf16.mxu0 0
    %531 = vmatmul.mubr.bf16.gmra.mxu0 %v372
    %v532 = vpop.f32.mrf.mxu0
    %v533 = vadd.f32 0.0, %v532
    %v534 = vpop.f32.mrf.mxu0
    %v535 = vpop.f32.mrf.mxu0
    %v536 = vadd.f32 0.0, %v535
    %v537 = vpop.f32.mrf.mxu0
    %538 = vmatprep.mubr.bf16.mxu0 0
    %539 = vmatmul.mubr.bf16.gmra.mxu0 %v373
    %v540 = vpop.f32.mrf.mxu0
    %v541 = vadd.f32 0.0, %v540
    %v542 = vpop.f32.mrf.mxu0
    %v543 = vpop.f32.mrf.mxu0
    %v544 = vadd.f32 0.0, %v543
    %v545 = vpop.f32.mrf.mxu0
    %546 = vmatprep.mubr.bf16.mxu0 0
    %547 = vmatmul.mubr.bf16.gmra.mxu0 %v374
    %v548 = vpop.f32.mrf.mxu0
    %v549 = vadd.f32 0.0, %v548
    %v550 = vpop.f32.mrf.mxu0
    %v551 = vpop.f32.mrf.mxu0
    %v552 = vadd.f32 0.0, %v551
    %v553 = vpop.f32.mrf.mxu0
    %554 = vmatprep.mubr.bf16.mxu0 0
    %555 = vmatmul.mubr.bf16.gmra.mxu0 %v375
    %v556 = vpop.f32.mrf.mxu0
    %v557 = vadd.f32 0.0, %v556
    %v558 = vpop.f32.mrf.mxu0
    %v559 = vpop.f32.mrf.mxu0
    %v560 = vadd.f32 0.0, %v559
    %v561 = vpop.f32.mrf.mxu0
    %562 = vmatprep.mubr.bf16.mxu0 0
    %563 = vmatmul.mubr.bf16.gmra.mxu0 %v376
    %v564 = vpop.f32.mrf.mxu0
    %v565 = vadd.f32 0.0, %v564
    %v566 = vpop.f32.mrf.mxu0
    %v567 = vpop.f32.mrf.mxu0
    %v568 = vadd.f32 0.0, %v567
    %v569 = vpop.f32.mrf.mxu0
    %570 = vmatprep.mubr.bf16.mxu0 0
    %571 = vmatmul.mubr.bf16.gmra.mxu0 %v377
    %v572 = vpop.f32.mrf.mxu0
    %v573 = vadd.f32 0.0, %v572
    %v574 = vpop.f32.mrf.mxu0
    %v575 = vpop.f32.mrf.mxu0
    %v576 = vadd.f32 0.0, %v575
    %v577 = vpop.f32.mrf.mxu0
    %578 = vmatprep.mubr.bf16.mxu0 0
    %579 = vmatmul.mubr.bf16.gmra.mxu0 %v378
    %v580 = vpop.f32.mrf.mxu0
    %v581 = vadd.f32 0.0, %v580
    %v582 = vpop.f32.mrf.mxu0
    %v583 = vpop.f32.mrf.mxu0
    %v584 = vadd.f32 0.0, %v583
    %v585 = vpop.f32.mrf.mxu0
    %586 = vmatprep.mubr.bf16.mxu0 0
    %587 = vmatmul.mubr.bf16.gmra.mxu0 %v379
    %v588 = vpop.f32.mrf.mxu0
    %v589 = vadd.f32 0.0, %v588
    %v590 = vpop.f32.mrf.mxu0
    %v591 = vpop.f32.mrf.mxu0
    %v592 = vadd.f32 0.0, %v591
    %v593 = vpop.f32.mrf.mxu0
    %594 = vmatprep.mubr.bf16.mxu0 0
    %595 = vmatmul.mubr.bf16.gmra.mxu0 %v380
    %v596 = vpop.f32.mrf.mxu0
    %v597 = vadd.f32 0.0, %v596
    %v598 = vpop.f32.mrf.mxu0
    %v599 = vpop.f32.mrf.mxu0
    %v600 = vadd.f32 0.0, %v599
    %v601 = vpop.f32.mrf.mxu0
    %602 = vmatprep.mubr.bf16.mxu0 0
    %603 = vmatmul.mubr.bf16.gmra.mxu0 %v381
    %v604 = vpop.f32.mrf.mxu0
    %v605 = vadd.f32 0.0, %v604
    %v606 = vpop.f32.mrf.mxu0
    %v607 = vpop.f32.mrf.mxu0
    %v608 = vadd.f32 0.0, %v607
    %v609 = vpop.f32.mrf.mxu0
    %610 = vmatprep.mubr.bf16.mxu0 0
    %611 = vmatmul.mubr.bf16.gmra.mxu0 %v382
    %v612 = vpop.f32.mrf.mxu0
    %v613 = vadd.f32 0.0, %v612
    %v614 = vpop.f32.mrf.mxu0
    %v615 = vpop.f32.mrf.mxu0
    %v616 = vadd.f32 0.0, %v615
    %v617 = vpop.f32.mrf.mxu0
    %618 = vmatprep.mubr.bf16.mxu0 0
    %619 = vmatmul.mubr.bf16.gmra.mxu0 %v383
    %v620 = vpop.f32.mrf.mxu0
    %v621 = vadd.f32 0.0, %v620
    %v622 = vpop.f32.mrf.mxu0
    %v623 = vpop.f32.mrf.mxu0
    %v624 = vadd.f32 0.0, %v623
    %v625 = vpop.f32.mrf.mxu0
    %626 = vmatprep.mubr.bf16.mxu0 0
    %627 = vmatmul.mubr.bf16.gmra.mxu0 %v384
    %v628 = vpop.f32.mrf.mxu0
    %v629 = vadd.f32 0.0, %v628
    %v630 = vpop.f32.mrf.mxu0
    %v631 = vpop.f32.mrf.mxu0
    %v632 = vadd.f32 0.0, %v631
    %v633 = vpop.f32.mrf.mxu0
    %634 = vmatprep.mubr.bf16.mxu0 0
    %635 = vmatmul.mubr.bf16.gmra.mxu0 %v385
    %v636 = vpop.f32.mrf.mxu0
    %v637 = vadd.f32 0.0, %v636
    %v638 = vpop.f32.mrf.mxu0
    %v639 = vpop.f32.mrf.mxu0
    %v640 = vadd.f32 0.0, %v639
    %v641 = vpop.f32.mrf.mxu0
    %642 = vmatprep.mubr.bf16.mxu0 0
    %643 = vmatmul.mubr.bf16.gmra.mxu0 %v386
    %v644 = vpop.f32.mrf.mxu0
    %v645 = vadd.f32 0.0, %v644
    %v646 = vpop.f32.mrf.mxu0
    %v647 = vpop.f32.mrf.mxu0
    %v648 = vadd.f32 0.0, %v647
    %v649 = vpop.f32.mrf.mxu0
    %650 = vmatprep.mubr.bf16.mxu0 0
    %651 = vmatmul.mubr.bf16.gmra.mxu0 %v387
    %v652 = vpop.f32.mrf.mxu0
    %v653 = vadd.f32 0.0, %v652
    %v654 = vpop.f32.mrf.mxu0
    %v655 = vpop.f32.mrf.mxu0
    %v656 = vadd.f32 0.0, %v655
    %v657 = vpop.f32.mrf.mxu0
    %658 = vmatprep.mubr.bf16.mxu0 0
    %659 = vmatmul.mubr.bf16.gmra.mxu0 %v388
    %v660 = vpop.f32.mrf.mxu0
    %v661 = vadd.f32 0.0, %v660
    %v662 = vpop.f32.mrf.mxu0
    %v663 = vpop.f32.mrf.mxu0
    %v664 = vadd.f32 0.0, %v663
    %v665 = vpop.f32.mrf.mxu0
    %666 = vmatprep.mubr.bf16.mxu0 0
    %667 = vmatmul.mubr.bf16.gmra.mxu0 %v389
    %v668 = vpop.f32.mrf.mxu0
    %v669 = vadd.f32 0.0, %v668
    %v670 = vpop.f32.mrf.mxu0
    %v671 = vpop.f32.mrf.mxu0
    %v672 = vadd.f32 0.0, %v671
    %v673 = vpop.f32.mrf.mxu0
    %674 = vmatprep.mubr.bf16.mxu0 0
    %675 = vmatmul.mubr.bf16.gmra.mxu0 %v390
    %v676 = vpop.f32.mrf.mxu0
    %v677 = vadd.f32 0.0, %v676
    %v678 = vpop.f32.mrf.mxu0
    %v679 = vpop.f32.mrf.mxu0
    %v680 = vadd.f32 0.0, %v679
    %v681 = vpop.f32.mrf.mxu0
    %682 = vmatprep.mubr.bf16.mxu0 0
    %683 = vmatmul.mubr.bf16.gmra.mxu0 %v391
    %v684 = vpop.f32.mrf.mxu0
    %v685 = vadd.f32 0.0, %v684
    %v686 = vpop.f32.mrf.mxu0
    %v687 = vpop.f32.mrf.mxu0
    %v688 = vadd.f32 0.0, %v687
    %v689 = vpop.f32.mrf.mxu0
    %690 = vmatprep.mubr.bf16.mxu0 0
    %691 = vmatmul.mubr.bf16.gmra.mxu0 %v392
    %v692 = vpop.f32.mrf.mxu0
    %v693 = vadd.f32 0.0, %v692
    %v694 = vpop.f32.mrf.mxu0
    %v695 = vpop.f32.mrf.mxu0
    %v696 = vadd.f32 0.0, %v695
    %v697 = vpop.f32.mrf.mxu0
    %698 = vmatprep.mubr.bf16.mxu0 0
    %699 = vmatmul.mubr.bf16.gmra.mxu0 %v393
    %v700 = vpop.f32.mrf.mxu0
    %v701 = vadd.f32 0.0, %v700
    %v702 = vpop.f32.mrf.mxu0
    %v703 = vpop.f32.mrf.mxu0
    %v704 = vadd.f32 0.0, %v703
    %v705 = vpop.f32.mrf.mxu0
    %706 = vmatprep.mubr.bf16.mxu0 0
    %707 = vmatmul.mubr.bf16.gmra.mxu0 %v394
    %v708 = vpop.f32.mrf.mxu0
    %v709 = vadd.f32 0.0, %v708
    %v710 = vpop.f32.mrf.mxu0
    %v711 = vpop.f32.mrf.mxu0
    %v712 = vadd.f32 0.0, %v711
    %v713 = vpop.f32.mrf.mxu0
    %714 = vmatprep.mubr.bf16.mxu0 0
    %715 = vmatmul.mubr.bf16.gmra.mxu0 %v395
    %v716 = vpop.f32.mrf.mxu0
    %v717 = vadd.f32 0.0, %v716
    %v718 = vpop.f32.mrf.mxu0
    %v719 = vpop.f32.mrf.mxu0
    %v720 = vadd.f32 0.0, %v719
    %v721 = vpop.f32.mrf.mxu0
    %722 = vmatprep.mubr.bf16.mxu0 0
    %723 = vmatmul.mubr.bf16.gmra.mxu0 %v396
    %v724 = vpop.f32.mrf.mxu0
    %v725 = vadd.f32 0.0, %v724
    %v726 = vpop.f32.mrf.mxu0
    %v727 = vpop.f32.mrf.mxu0
    %v728 = vadd.f32 0.0, %v727
    %v729 = vpop.f32.mrf.mxu0
    %730 = vmatprep.mubr.bf16.mxu0 0
    %731 = vmatmul.mubr.bf16.gmra.mxu0 %v397
    %v732 = vpop.f32.mrf.mxu0
    %v733 = vadd.f32 0.0, %v732
    %v734 = vpop.f32.mrf.mxu0
    %v735 = vpop.f32.mrf.mxu0
    %v736 = vadd.f32 0.0, %v735
    %v737 = vpop.f32.mrf.mxu0
    %738 = vmatprep.mubr.bf16.mxu0 0
    %739 = vmatmul.mubr.bf16.gmra.mxu0 %v398
    %v740 = vpop.f32.mrf.mxu0
    %v741 = vadd.f32 0.0, %v740
    %v742 = vpop.f32.mrf.mxu0
    %v743 = vpop.f32.mrf.mxu0
    %v744 = vadd.f32 0.0, %v743
    %v745 = vpop.f32.mrf.mxu0
    %746 = vmatprep.mubr.bf16.mxu0 0
    %747 = vmatmul.mubr.bf16.gmra.mxu0 %v399
    %v748 = vpop.f32.mrf.mxu0
    %v749 = vadd.f32 0.0, %v748
    %v750 = vpop.f32.mrf.mxu0
    %v751 = vpop.f32.mrf.mxu0
    %v752 = vadd.f32 0.0, %v751
    %v753 = vpop.f32.mrf.mxu0
    %754 = vmatprep.mubr.bf16.mxu0 0
    %755 = vmatmul.mubr.bf16.gmra.mxu0 %v400
    %v756 = vpop.f32.mrf.mxu0
    %v757 = vadd.f32 0.0, %v756
    %v758 = vpop.f32.mrf.mxu0
    %v759 = vpop.f32.mrf.mxu0
    %v760 = vadd.f32 0.0, %v759
    %v761 = vpop.f32.mrf.mxu0
    %762 = vmatprep.mubr.bf16.mxu0 0
    %763 = vmatmul.mubr.bf16.gmra.mxu0 %v401
    %v764 = vpop.f32.mrf.mxu0
    %v765 = vadd.f32 0.0, %v764
    %v766 = vpop.f32.mrf.mxu0
    %v767 = vpop.f32.mrf.mxu0
    %v768 = vadd.f32 0.0, %v767
    %v769 = vpop.f32.mrf.mxu0
    %770 = vdwg.mxu0
    %v771 = vadd.f32 %v98, %v517
    %v772 = vadd.f32 %v99, %v520
    %v773 = vadd.f32 %v100, %v525
    %v774 = vadd.f32 %v101, %v528
    %v775 = vadd.f32 %v102, %v533
    %v776 = vadd.f32 %v103, %v536
    %v777 = vadd.f32 %v104, %v541
    %v778 = vadd.f32 %v105, %v544
    %v779 = vadd.f32 %v106, %v549
    %v780 = vadd.f32 %v107, %v552
    %v781 = vadd.f32 %v108, %v557
    %v782 = vadd.f32 %v109, %v560
    %v783 = vadd.f32 %v110, %v565
    %v784 = vadd.f32 %v111, %v568
    %v785 = vadd.f32 %v112, %v573
    %v786 = vadd.f32 %v113, %v576
    %v787 = vadd.f32 %v114, %v581
    %v788 = vadd.f32 %v115, %v584
    %v789 = vadd.f32 %v116, %v589
    %v790 = vadd.f32 %v117, %v592
    %v791 = vadd.f32 %v118, %v597
    %v792 = vadd.f32 %v119, %v600
    %v793 = vadd.f32 %v120, %v605
    %v794 = vadd.f32 %v121, %v608
    %v795 = vadd.f32 %v122, %v613
    %v796 = vadd.f32 %v123, %v616
    %v797 = vadd.f32 %v124, %v621
    %v798 = vadd.f32 %v125, %v624
    %v799 = vadd.f32 %v126, %v629
    %v800 = vadd.f32 %v127, %v632
    %v801 = vadd.f32 %v128, %v637
    %v802 = vadd.f32 %v129, %v640
    %v803 = vadd.f32 %v130, %v645
    %v804 = vadd.f32 %v131, %v648
    %v805 = vadd.f32 %v132, %v653
    %v806 = vadd.f32 %v133, %v656
    %v807 = vadd.f32 %v134, %v661
    %v808 = vadd.f32 %v135, %v664
    %v809 = vadd.f32 %v136, %v669
    %v810 = vadd.f32 %v137, %v672
    %v811 = vadd.f32 %v138, %v677
    %v812 = vadd.f32 %v139, %v680
    %v813 = vadd.f32 %v140, %v685
    %v814 = vadd.f32 %v141, %v688
    %v815 = vadd.f32 %v142, %v693
    %v816 = vadd.f32 %v143, %v696
    %v817 = vadd.f32 %v144, %v701
    %v818 = vadd.f32 %v145, %v704
    %v819 = vadd.f32 %v146, %v709
    %v820 = vadd.f32 %v147, %v712
    %v821 = vadd.f32 %v148, %v717
    %v822 = vadd.f32 %v149, %v720
    %v823 = vadd.f32 %v150, %v725
    %v824 = vadd.f32 %v151, %v728
    %v825 = vadd.f32 %v152, %v733
    %v826 = vadd.f32 %v153, %v736
    %v827 = vadd.f32 %v154, %v741
    %v828 = vadd.f32 %v155, %v744
    %v829 = vadd.f32 %v156, %v749
    %v830 = vadd.f32 %v157, %v752
    %v831 = vadd.f32 %v158, %v757
    %v832 = vadd.f32 %v159, %v760
    %v833 = vadd.f32 %v160, %v765
    %v834 = vadd.f32 %v161, %v768
    %vm835 = vcmask 523264
    %836 = vst.msk [vmem:[#allocation2] sm:$0xff] %vm835, %v771
    %837 = vst.msk [vmem:[#allocation2 + $0x8] sm:$0xff] %vm835, %v772
    %838 = vst.msk [vmem:[#allocation2 + $0x10] sm:$0xff] %vm835, %v773
    %839 = vst.msk [vmem:[#allocation2 + $0x18] sm:$0xff] %vm835, %v774
    %840 = vst.msk [vmem:[#allocation2 + $0x20] sm:$0xff] %vm835, %v775
    %841 = vst.msk [vmem:[#allocation2 + $0x28] sm:$0xff] %vm835, %v776
    %842 = vst.msk [vmem:[#allocation2 + $0x30] sm:$0xff] %vm835, %v777
    %843 = vst.msk [vmem:[#allocation2 + $0x38] sm:$0xff] %vm835, %v778
    %844 = vst.msk [vmem:[#allocation2 + $0x40] sm:$0xff] %vm835, %v779
    %845 = vst.msk [vmem:[#allocation2 + $0x48] sm:$0xff] %vm835, %v780
    %846 = vst.msk [vmem:[#allocation2 + $0x50] sm:$0xff] %vm835, %v781
    %847 = vst.msk [vmem:[#allocation2 + $0x58] sm:$0xff] %vm835, %v782
    %848 = vst.msk [vmem:[#allocation2 + $0x60] sm:$0xff] %vm835, %v783
    %849 = vst.msk [vmem:[#allocation2 + $0x68] sm:$0xff] %vm835, %v784
    %850 = vst.msk [vmem:[#allocation2 + $0x70] sm:$0xff] %vm835, %v785
    %851 = vst.msk [vmem:[#allocation2 + $0x78] sm:$0xff] %vm835, %v786
    %852 = vst.msk [vmem:[#allocation2 + $0x80] sm:$0xff] %vm835, %v787
    %853 = vst.msk [vmem:[#allocation2 + $0x88] sm:$0xff] %vm835, %v788
    %854 = vst.msk [vmem:[#allocation2 + $0x90] sm:$0xff] %vm835, %v789
    %855 = vst.msk [vmem:[#allocation2 + $0x98] sm:$0xff] %vm835, %v790
    %856 = vst.msk [vmem:[#allocation2 + $0xa0] sm:$0xff] %vm835, %v791
    %857 = vst.msk [vmem:[#allocation2 + $0xa8] sm:$0xff] %vm835, %v792
    %858 = vst.msk [vmem:[#allocation2 + $0xb0] sm:$0xff] %vm835, %v793
    %859 = vst.msk [vmem:[#allocation2 + $0xb8] sm:$0xff] %vm835, %v794
    %860 = vst.msk [vmem:[#allocation2 + $0xc0] sm:$0xff] %vm835, %v795
    %861 = vst.msk [vmem:[#allocation2 + $0xc8] sm:$0xff] %vm835, %v796
    %862 = vst.msk [vmem:[#allocation2 + $0xd0] sm:$0xff] %vm835, %v797
    %863 = vst.msk [vmem:[#allocation2 + $0xd8] sm:$0xff] %vm835, %v798
    %864 = vst.msk [vmem:[#allocation2 + $0xe0] sm:$0xff] %vm835, %v799
    %865 = vst.msk [vmem:[#allocation2 + $0xe8] sm:$0xff] %vm835, %v800
    %866 = vst.msk [vmem:[#allocation2 + $0xf0] sm:$0xff] %vm835, %v801
    %867 = vst.msk [vmem:[#allocation2 + $0xf8] sm:$0xff] %vm835, %v802
    %868 = vst.msk [vmem:[#allocation2 + $0x100] sm:$0xff] %vm835, %v803
    %869 = vst.msk [vmem:[#allocation2 + $0x108] sm:$0xff] %vm835, %v804
    %870 = vst.msk [vmem:[#allocation2 + $0x110] sm:$0xff] %vm835, %v805
    %871 = vst.msk [vmem:[#allocation2 + $0x118] sm:$0xff] %vm835, %v806
    %872 = vst.msk [vmem:[#allocation2 + $0x120] sm:$0xff] %vm835, %v807
    %873 = vst.msk [vmem:[#allocation2 + $0x128] sm:$0xff] %vm835, %v808
    %874 = vst.msk [vmem:[#allocation2 + $0x130] sm:$0xff] %vm835, %v809
    %875 = vst.msk [vmem:[#allocation2 + $0x138] sm:$0xff] %vm835, %v810
    %876 = vst.msk [vmem:[#allocation2 + $0x140] sm:$0xff] %vm835, %v811
    %877 = vst.msk [vmem:[#allocation2 + $0x148] sm:$0xff] %vm835, %v812
    %878 = vst.msk [vmem:[#allocation2 + $0x150] sm:$0xff] %vm835, %v813
    %879 = vst.msk [vmem:[#allocation2 + $0x158] sm:$0xff] %vm835, %v814
    %880 = vst.msk [vmem:[#allocation2 + $0x160] sm:$0xff] %vm835, %v815
    %881 = vst.msk [vmem:[#allocation2 + $0x168] sm:$0xff] %vm835, %v816
    %882 = vst.msk [vmem:[#allocation2 + $0x170] sm:$0xff] %vm835, %v817
    %883 = vst.msk [vmem:[#allocation2 + $0x178] sm:$0xff] %vm835, %v818
    %884 = vst.msk [vmem:[#allocation2 + $0x180] sm:$0xff] %vm835, %v819
    %885 = vst.msk [vmem:[#allocation2 + $0x188] sm:$0xff] %vm835, %v820
    %886 = vst.msk [vmem:[#allocation2 + $0x190] sm:$0xff] %vm835, %v821
    %887 = vst.msk [vmem:[#allocation2 + $0x198] sm:$0xff] %vm835, %v822
    %888 = vst.msk [vmem:[#allocation2 + $0x1a0] sm:$0xff] %vm835, %v823
    %889 = vst.msk [vmem:[#allocation2 + $0x1a8] sm:$0xff] %vm835, %v824
    %890 = vst.msk [vmem:[#allocation2 + $0x1b0] sm:$0xff] %vm835, %v825
    %891 = vst.msk [vmem:[#allocation2 + $0x1b8] sm:$0xff] %vm835, %v826
    %892 = vst.msk [vmem:[#allocation2 + $0x1c0] sm:$0xff] %vm835, %v827
    %893 = vst.msk [vmem:[#allocation2 + $0x1c8] sm:$0xff] %vm835, %v828
    %894 = vst.msk [vmem:[#allocation2 + $0x1d0] sm:$0xff] %vm835, %v829
    %895 = vst.msk [vmem:[#allocation2 + $0x1d8] sm:$0xff] %vm835, %v830
    %896 = vst.msk [vmem:[#allocation2 + $0x1e0] sm:$0xff] %vm835, %v831
    %897 = vst.msk [vmem:[#allocation2 + $0x1e8] sm:$0xff] %vm835, %v832
    %898 = vst.msk [vmem:[#allocation2 + $0x1f0] sm:$0xff] %vm835, %v833
    %899 = vst.msk [vmem:[#allocation2 + $0x1f8] sm:$0xff] %vm835, %v834
    // Predicated region
    $region22: #{tpu_custom_call.1} parent=1 // pred_check
      %p900 = pneg %p29
    $region23: #{tpu_custom_call.1} parent=1 // pred_check_branch
      %902 = sbr.rel (%p900) target = $region25
    $region24: #{tpu_custom_call.1} parent=1 // pred_region
      %v903 = vld [vmem:[#allocation2] sm:$0xff]
      %v904 = vld [vmem:[#allocation2 + $0x8] sm:$0xff]
      %v905 = vld [vmem:[#allocation2 + $0x10] sm:$0xff]
      %v906 = vld [vmem:[#allocation2 + $0x18] sm:$0xff]
      %v907 = vld [vmem:[#allocation2 + $0x20] sm:$0xff]
      %v908 = vld [vmem:[#allocation2 + $0x28] sm:$0xff]
      %v909 = vld [vmem:[#allocation2 + $0x30] sm:$0xff]
      %v910 = vld [vmem:[#allocation2 + $0x38] sm:$0xff]
      %v911 = vld [vmem:[#allocation2 + $0x40] sm:$0xff]
      %v912 = vld [vmem:[#allocation2 + $0x48] sm:$0xff]
      %v913 = vld [vmem:[#allocation2 + $0x50] sm:$0xff]
      %v914 = vld [vmem:[#allocation2 + $0x58] sm:$0xff]
      %v915 = vld [vmem:[#allocation2 + $0x60] sm:$0xff]
      %v916 = vld [vmem:[#allocation2 + $0x68] sm:$0xff]
      %v917 = vld [vmem:[#allocation2 + $0x70] sm:$0xff]
      %v918 = vld [vmem:[#allocation2 + $0x78] sm:$0xff]
      %v919 = vld [vmem:[#allocation2 + $0x80] sm:$0xff]
      %v920 = vld [vmem:[#allocation2 + $0x88] sm:$0xff]
      %v921 = vld [vmem:[#allocation2 + $0x90] sm:$0xff]
      %v922 = vld [vmem:[#allocation2 + $0x98] sm:$0xff]
      %v923 = vld [vmem:[#allocation2 + $0xa0] sm:$0xff]
      %v924 = vld [vmem:[#allocation2 + $0xa8] sm:$0xff]
      %v925 = vld [vmem:[#allocation2 + $0xb0] sm:$0xff]
      %v926 = vld [vmem:[#allocation2 + $0xb8] sm:$0xff]
      %v927 = vld [vmem:[#allocation2 + $0xc0] sm:$0xff]
      %v928 = vld [vmem:[#allocation2 + $0xc8] sm:$0xff]
      %v929 = vld [vmem:[#allocation2 + $0xd0] sm:$0xff]
      %v930 = vld [vmem:[#allocation2 + $0xd8] sm:$0xff]
      %v931 = vld [vmem:[#allocation2 + $0xe0] sm:$0xff]
      %v932 = vld [vmem:[#allocation2 + $0xe8] sm:$0xff]
      %v933 = vld [vmem:[#allocation2 + $0xf0] sm:$0xff]
      %v934 = vld [vmem:[#allocation2 + $0xf8] sm:$0xff]
      %v935 = vld [vmem:[#allocation2 + $0x100] sm:$0xff]
      %v936 = vld [vmem:[#allocation2 + $0x108] sm:$0xff]
      %v937 = vld [vmem:[#allocation2 + $0x110] sm:$0xff]
      %v938 = vld [vmem:[#allocation2 + $0x118] sm:$0xff]
      %v939 = vld [vmem:[#allocation2 + $0x120] sm:$0xff]
      %v940 = vld [vmem:[#allocation2 + $0x128] sm:$0xff]
      %v941 = vld [vmem:[#allocation2 + $0x130] sm:$0xff]
      %v942 = vld [vmem:[#allocation2 + $0x138] sm:$0xff]
      %v943 = vld [vmem:[#allocation2 + $0x140] sm:$0xff]
      %v944 = vld [vmem:[#allocation2 + $0x148] sm:$0xff]
      %v945 = vld [vmem:[#allocation2 + $0x150] sm:$0xff]
      %v946 = vld [vmem:[#allocation2 + $0x158] sm:$0xff]
      %v947 = vld [vmem:[#allocation2 + $0x160] sm:$0xff]
      %v948 = vld [vmem:[#allocation2 + $0x168] sm:$0xff]
      %v949 = vld [vmem:[#allocation2 + $0x170] sm:$0xff]
      %v950 = vld [vmem:[#allocation2 + $0x178] sm:$0xff]
      %v951 = vld [vmem:[#allocation2 + $0x180] sm:$0xff]
      %v952 = vld [vmem:[#allocation2 + $0x188] sm:$0xff]
      %v953 = vld [vmem:[#allocation2 + $0x190] sm:$0xff]
      %v954 = vld [vmem:[#allocation2 + $0x198] sm:$0xff]
      %v955 = vld [vmem:[#allocation2 + $0x1a0] sm:$0xff]
      %v956 = vld [vmem:[#allocation2 + $0x1a8] sm:$0xff]
      %v957 = vld [vmem:[#allocation2 + $0x1b0] sm:$0xff]
      %v958 = vld [vmem:[#allocation2 + $0x1b8] sm:$0xff]
      %v959 = vld [vmem:[#allocation2 + $0x1c0] sm:$0xff]
      %v960 = vld [vmem:[#allocation2 + $0x1c8] sm:$0xff]
      %v961 = vld [vmem:[#allocation2 + $0x1d0] sm:$0xff]
      %v962 = vld [vmem:[#allocation2 + $0x1d8] sm:$0xff]
      %v963 = vld [vmem:[#allocation2 + $0x1e0] sm:$0xff]
      %v964 = vld [vmem:[#allocation2 + $0x1e8] sm:$0xff]
      %v965 = vld [vmem:[#allocation2 + $0x1f0] sm:$0xff]
      %v966 = vld [vmem:[#allocation2 + $0x1f8] sm:$0xff]
      %v967 = vld [vmem:[%s2] sm:$0x1]
      %v969 = vlaneseq
      %v970 = vshrl.u32 %v969, 7
      %v971 = vsub.s32 0, %v970
      %v972 = vrot.slane %v967, %v971
      %v974 = vadd.f32 %v903, %v972
      %v975 = vadd.f32 %v904, %v972
      %v976 = vadd.f32 %v905, %v972
      %v977 = vadd.f32 %v906, %v972
      %v978 = vadd.f32 %v907, %v972
      %v979 = vadd.f32 %v908, %v972
      %v980 = vadd.f32 %v909, %v972
      %v981 = vadd.f32 %v910, %v972
      %v982 = vadd.f32 %v911, %v972
      %v983 = vadd.f32 %v912, %v972
      %v984 = vadd.f32 %v913, %v972
      %v985 = vadd.f32 %v914, %v972
      %v986 = vadd.f32 %v915, %v972
      %v987 = vadd.f32 %v916, %v972
      %v988 = vadd.f32 %v917, %v972
      %v989 = vadd.f32 %v918, %v972
      %v990 = vadd.f32 %v919, %v972
      %v991 = vadd.f32 %v920, %v972
      %v992 = vadd.f32 %v921, %v972
      %v993 = vadd.f32 %v922, %v972
      %v994 = vadd.f32 %v923, %v972
      %v995 = vadd.f32 %v924, %v972
      %v996 = vadd.f32 %v925, %v972
      %v997 = vadd.f32 %v926, %v972
      %v998 = vadd.f32 %v927, %v972
      %v999 = vadd.f32 %v928, %v972
      %v1000 = vadd.f32 %v929, %v972
      %v1001 = vadd.f32 %v930, %v972
      %v1002 = vadd.f32 %v931, %v972
      %v1003 = vadd.f32 %v932, %v972
      %v1004 = vadd.f32 %v933, %v972
      %v1005 = vadd.f32 %v934, %v972
      %v1006 = vadd.f32 %v935, %v972
      %v1007 = vadd.f32 %v936, %v972
      %v1008 = vadd.f32 %v937, %v972
      %v1009 = vadd.f32 %v938, %v972
      %v1010 = vadd.f32 %v939, %v972
      %v1011 = vadd.f32 %v940, %v972
      %v1012 = vadd.f32 %v941, %v972
      %v1013 = vadd.f32 %v942, %v972
      %v1014 = vadd.f32 %v943, %v972
      %v1015 = vadd.f32 %v944, %v972
      %v1016 = vadd.f32 %v945, %v972
      %v1017 = vadd.f32 %v946, %v972
      %v1018 = vadd.f32 %v947, %v972
      %v1019 = vadd.f32 %v948, %v972
      %v1020 = vadd.f32 %v949, %v972
      %v1021 = vadd.f32 %v950, %v972
      %v1022 = vadd.f32 %v951, %v972
      %v1023 = vadd.f32 %v952, %v972
      %v1024 = vadd.f32 %v953, %v972
      %v1025 = vadd.f32 %v954, %v972
      %v1026 = vadd.f32 %v955, %v972
      %v1027 = vadd.f32 %v956, %v972
      %v1028 = vadd.f32 %v957, %v972
      %v1029 = vadd.f32 %v958, %v972
      %v1030 = vadd.f32 %v959, %v972
      %v1031 = vadd.f32 %v960, %v972
      %v1032 = vadd.f32 %v961, %v972
      %v1033 = vadd.f32 %v962, %v972
      %v1034 = vadd.f32 %v963, %v972
      %v1035 = vadd.f32 %v964, %v972
      %v1036 = vadd.f32 %v965, %v972
      %v1037 = vadd.f32 %v966, %v972
      %v1038 = vmax.f32 %v974, 0.0
      %v1039 = vmax.f32 %v975, 0.0
      %v1040 = vmax.f32 %v976, 0.0
      %v1041 = vmax.f32 %v977, 0.0
      %v1042 = vmax.f32 %v978, 0.0
      %v1043 = vmax.f32 %v979, 0.0
      %v1044 = vmax.f32 %v980, 0.0
      %v1045 = vmax.f32 %v981, 0.0
      %v1046 = vmax.f32 %v982, 0.0
      %v1047 = vmax.f32 %v983, 0.0
      %v1048 = vmax.f32 %v984, 0.0
      %v1049 = vmax.f32 %v985, 0.0
      %v1050 = vmax.f32 %v986, 0.0
      %v1051 = vmax.f32 %v987, 0.0
      %v1052 = vmax.f32 %v988, 0.0
      %v1053 = vmax.f32 %v989, 0.0
      %v1054 = vmax.f32 %v990, 0.0
      %v1055 = vmax.f32 %v991, 0.0
      %v1056 = vmax.f32 %v992, 0.0
      %v1057 = vmax.f32 %v993, 0.0
      %v1058 = vmax.f32 %v994, 0.0
      %v1059 = vmax.f32 %v995, 0.0
      %v1060 = vmax.f32 %v996, 0.0
      %v1061 = vmax.f32 %v997, 0.0
      %v1062 = vmax.f32 %v998, 0.0
      %v1063 = vmax.f32 %v999, 0.0
      %v1064 = vmax.f32 %v1000, 0.0
      %v1065 = vmax.f32 %v1001, 0.0
      %v1066 = vmax.f32 %v1002, 0.0
      %v1067 = vmax.f32 %v1003, 0.0
      %v1068 = vmax.f32 %v1004, 0.0
      %v1069 = vmax.f32 %v1005, 0.0
      %v1070 = vmax.f32 %v1006, 0.0
      %v1071 = vmax.f32 %v1007, 0.0
      %v1072 = vmax.f32 %v1008, 0.0
      %v1073 = vmax.f32 %v1009, 0.0
      %v1074 = vmax.f32 %v1010, 0.0
      %v1075 = vmax.f32 %v1011, 0.0
      %v1076 = vmax.f32 %v1012, 0.0
      %v1077 = vmax.f32 %v1013, 0.0
      %v1078 = vmax.f32 %v1014, 0.0
      %v1079 = vmax.f32 %v1015, 0.0
      %v1080 = vmax.f32 %v1016, 0.0
      %v1081 = vmax.f32 %v1017, 0.0
      %v1082 = vmax.f32 %v1018, 0.0
      %v1083 = vmax.f32 %v1019, 0.0
      %v1084 = vmax.f32 %v1020, 0.0
      %v1085 = vmax.f32 %v1021, 0.0
      %v1086 = vmax.f32 %v1022, 0.0
      %v1087 = vmax.f32 %v1023, 0.0
      %v1088 = vmax.f32 %v1024, 0.0
      %v1089 = vmax.f32 %v1025, 0.0
      %v1090 = vmax.f32 %v1026, 0.0
      %v1091 = vmax.f32 %v1027, 0.0
      %v1092 = vmax.f32 %v1028, 0.0
      %v1093 = vmax.f32 %v1029, 0.0
      %v1094 = vmax.f32 %v1030, 0.0
      %v1095 = vmax.f32 %v1031, 0.0
      %v1096 = vmax.f32 %v1032, 0.0
      %v1097 = vmax.f32 %v1033, 0.0
      %v1098 = vmax.f32 %v1034, 0.0
      %v1099 = vmax.f32 %v1035, 0.0
      %v1100 = vmax.f32 %v1036, 0.0
      %v1101 = vmax.f32 %v1037, 0.0
      %v1102 = vpack.c.bf16 %v1039, %v1038
      %v1103 = vpack.c.bf16 %v1041, %v1040
      %v1104 = vpack.c.bf16 %v1043, %v1042
      %v1105 = vpack.c.bf16 %v1045, %v1044
      %v1106 = vpack.c.bf16 %v1047, %v1046
      %v1107 = vpack.c.bf16 %v1049, %v1048
      %v1108 = vpack.c.bf16 %v1051, %v1050
      %v1109 = vpack.c.bf16 %v1053, %v1052
      %v1110 = vpack.c.bf16 %v1055, %v1054
      %v1111 = vpack.c.bf16 %v1057, %v1056
      %v1112 = vpack.c.bf16 %v1059, %v1058
      %v1113 = vpack.c.bf16 %v1061, %v1060
      %v1114 = vpack.c.bf16 %v1063, %v1062
      %v1115 = vpack.c.bf16 %v1065, %v1064
      %v1116 = vpack.c.bf16 %v1067, %v1066
      %v1117 = vpack.c.bf16 %v1069, %v1068
      %v1118 = vpack.c.bf16 %v1071, %v1070
      %v1119 = vpack.c.bf16 %v1073, %v1072
      %v1120 = vpack.c.bf16 %v1075, %v1074
      %v1121 = vpack.c.bf16 %v1077, %v1076
      %v1122 = vpack.c.bf16 %v1079, %v1078
      %v1123 = vpack.c.bf16 %v1081, %v1080
      %v1124 = vpack.c.bf16 %v1083, %v1082
      %v1125 = vpack.c.bf16 %v1085, %v1084
      %v1126 = vpack.c.bf16 %v1087, %v1086
      %v1127 = vpack.c.bf16 %v1089, %v1088
      %v1128 = vpack.c.bf16 %v1091, %v1090
      %v1129 = vpack.c.bf16 %v1093, %v1092
      %v1130 = vpack.c.bf16 %v1095, %v1094
      %v1131 = vpack.c.bf16 %v1097, %v1096
      %v1132 = vpack.c.bf16 %v1099, %v1098
      %v1133 = vpack.c.bf16 %v1101, %v1100
      %v1166 = vunpack.c.l.b16 %v1102
      %v1167 = vunpack.c.h.b16 %v1102
      %v1168 = vunpack.c.l.b16 %v1103
      %v1169 = vunpack.c.h.b16 %v1103
      %v1170 = vunpack.c.l.b16 %v1104
      %v1171 = vunpack.c.h.b16 %v1104
      %v1172 = vunpack.c.l.b16 %v1105
      %v1173 = vunpack.c.h.b16 %v1105
      %v1174 = vunpack.c.l.b16 %v1106
      %v1175 = vunpack.c.h.b16 %v1106
      %v1176 = vunpack.c.l.b16 %v1107
      %v1177 = vunpack.c.h.b16 %v1107
      %v1178 = vunpack.c.l.b16 %v1108
      %v1179 = vunpack.c.h.b16 %v1108
      %v1180 = vunpack.c.l.b16 %v1109
      %v1181 = vunpack.c.h.b16 %v1109
      %v1182 = vunpack.c.l.b16 %v1110
      %v1183 = vunpack.c.h.b16 %v1110
      %v1184 = vunpack.c.l.b16 %v1111
      %v1185 = vunpack.c.h.b16 %v1111
      %v1186 = vunpack.c.l.b16 %v1112
      %v1187 = vunpack.c.h.b16 %v1112
      %v1188 = vunpack.c.l.b16 %v1113
      %v1189 = vunpack.c.h.b16 %v1113
      %v1190 = vunpack.c.l.b16 %v1114
      %v1191 = vunpack.c.h.b16 %v1114
      %v1192 = vunpack.c.l.b16 %v1115
      %v1193 = vunpack.c.h.b16 %v1115
      %v1194 = vunpack.c.l.b16 %v1116
      %v1195 = vunpack.c.h.b16 %v1116
      %v1196 = vunpack.c.l.b16 %v1117
      %v1197 = vunpack.c.h.b16 %v1117
      %v1198 = vunpack.c.l.b16 %v1118
      %v1199 = vunpack.c.h.b16 %v1118
      %v1200 = vunpack.c.l.b16 %v1119
      %v1201 = vunpack.c.h.b16 %v1119
      %v1202 = vunpack.c.l.b16 %v1120
      %v1203 = vunpack.c.h.b16 %v1120
      %v1204 = vunpack.c.l.b16 %v1121
      %v1205 = vunpack.c.h.b16 %v1121
      %v1206 = vunpack.c.l.b16 %v1122
      %v1207 = vunpack.c.h.b16 %v1122
      %v1208 = vunpack.c.l.b16 %v1123
      %v1209 = vunpack.c.h.b16 %v1123
      %v1210 = vunpack.c.l.b16 %v1124
      %v1211 = vunpack.c.h.b16 %v1124
      %v1212 = vunpack.c.l.b16 %v1125
      %v1213 = vunpack.c.h.b16 %v1125
      %v1214 = vunpack.c.l.b16 %v1126
      %v1215 = vunpack.c.h.b16 %v1126
      %v1216 = vunpack.c.l.b16 %v1127
      %v1217 = vunpack.c.h.b16 %v1127
      %v1218 = vunpack.c.l.b16 %v1128
      %v1219 = vunpack.c.h.b16 %v1128
      %v1220 = vunpack.c.l.b16 %v1129
      %v1221 = vunpack.c.h.b16 %v1129
      %v1222 = vunpack.c.l.b16 %v1130
      %v1223 = vunpack.c.h.b16 %v1130
      %v1224 = vunpack.c.l.b16 %v1131
      %v1225 = vunpack.c.h.b16 %v1131
      %v1226 = vunpack.c.l.b16 %v1132
      %v1227 = vunpack.c.h.b16 %v1132
      %v1228 = vunpack.c.l.b16 %v1133
      %v1229 = vunpack.c.h.b16 %v1133
      %v1230 = vpack.c.b16 %v1166, %v1166
      %v1231 = vpack.c.b16 %v1167, %v1167
      %v1232 = vpack.c.b16 %v1168, %v1168
      %v1233 = vpack.c.b16 %v1169, %v1169
      %v1234 = vpack.c.b16 %v1170, %v1170
      %v1235 = vpack.c.b16 %v1171, %v1171
      %v1236 = vpack.c.b16 %v1172, %v1172
      %v1237 = vpack.c.b16 %v1173, %v1173
      %v1238 = vpack.c.b16 %v1174, %v1174
      %v1239 = vpack.c.b16 %v1175, %v1175
      %v1240 = vpack.c.b16 %v1176, %v1176
      %v1241 = vpack.c.b16 %v1177, %v1177
      %v1242 = vpack.c.b16 %v1178, %v1178
      %v1243 = vpack.c.b16 %v1179, %v1179
      %v1244 = vpack.c.b16 %v1180, %v1180
      %v1245 = vpack.c.b16 %v1181, %v1181
      %v1246 = vpack.c.b16 %v1182, %v1182
      %v1247 = vpack.c.b16 %v1183, %v1183
      %v1248 = vpack.c.b16 %v1184, %v1184
      %v1249 = vpack.c.b16 %v1185, %v1185
      %v1250 = vpack.c.b16 %v1186, %v1186
      %v1251 = vpack.c.b16 %v1187, %v1187
      %v1252 = vpack.c.b16 %v1188, %v1188
      %v1253 = vpack.c.b16 %v1189, %v1189
      %v1254 = vpack.c.b16 %v1190, %v1190
      %v1255 = vpack.c.b16 %v1191, %v1191
      %v1256 = vpack.c.b16 %v1192, %v1192
      %v1257 = vpack.c.b16 %v1193, %v1193
      %v1258 = vpack.c.b16 %v1194, %v1194
      %v1259 = vpack.c.b16 %v1195, %v1195
      %v1260 = vpack.c.b16 %v1196, %v1196
      %v1261 = vpack.c.b16 %v1197, %v1197
      %v1262 = vpack.c.b16 %v1198, %v1198
      %v1263 = vpack.c.b16 %v1199, %v1199
      %v1264 = vpack.c.b16 %v1200, %v1200
      %v1265 = vpack.c.b16 %v1201, %v1201
      %v1266 = vpack.c.b16 %v1202, %v1202
      %v1267 = vpack.c.b16 %v1203, %v1203
      %v1268 = vpack.c.b16 %v1204, %v1204
      %v1269 = vpack.c.b16 %v1205, %v1205
      %v1270 = vpack.c.b16 %v1206, %v1206
      %v1271 = vpack.c.b16 %v1207, %v1207
      %v1272 = vpack.c.b16 %v1208, %v1208
      %v1273 = vpack.c.b16 %v1209, %v1209
      %v1274 = vpack.c.b16 %v1210, %v1210
      %v1275 = vpack.c.b16 %v1211, %v1211
      %v1276 = vpack.c.b16 %v1212, %v1212
      %v1277 = vpack.c.b16 %v1213, %v1213
      %v1278 = vpack.c.b16 %v1214, %v1214
      %v1279 = vpack.c.b16 %v1215, %v1215
      %v1280 = vpack.c.b16 %v1216, %v1216
      %v1281 = vpack.c.b16 %v1217, %v1217
      %v1282 = vpack.c.b16 %v1218, %v1218
      %v1283 = vpack.c.b16 %v1219, %v1219
      %v1284 = vpack.c.b16 %v1220, %v1220
      %v1285 = vpack.c.b16 %v1221, %v1221
      %v1286 = vpack.c.b16 %v1222, %v1222
      %v1287 = vpack.c.b16 %v1223, %v1223
      %v1288 = vpack.c.b16 %v1224, %v1224
      %v1289 = vpack.c.b16 %v1225, %v1225
      %v1290 = vpack.c.b16 %v1226, %v1226
      %v1291 = vpack.c.b16 %v1227, %v1227
      %v1292 = vpack.c.b16 %v1228, %v1228
      %v1293 = vpack.c.b16 %v1229, %v1229
      %vm1358 = vcmask 519168
      %1359 = vst.msk [vmem:[%s3] sm:$0xf] %vm1358, %v1230
      %1360 = vst.msk [vmem:[%s3 + $0x4] sm:$0xf] %vm1358, %v1231
      %1361 = vst.msk [vmem:[%s3 + $0x8] sm:$0xf] %vm1358, %v1232
      %1362 = vst.msk [vmem:[%s3 + $0xc] sm:$0xf] %vm1358, %v1233
      %1363 = vst.msk [vmem:[%s3 + $0x10] sm:$0xf] %vm1358, %v1234
      %1364 = vst.msk [vmem:[%s3 + $0x14] sm:$0xf] %vm1358, %v1235
      %1365 = vst.msk [vmem:[%s3 + $0x18] sm:$0xf] %vm1358, %v1236
      %1366 = vst.msk [vmem:[%s3 + $0x1c] sm:$0xf] %vm1358, %v1237
      %1367 = vst.msk [vmem:[%s3 + $0x20] sm:$0xf] %vm1358, %v1238
      %1368 = vst.msk [vmem:[%s3 + $0x24] sm:$0xf] %vm1358, %v1239
      %1369 = vst.msk [vmem:[%s3 + $0x28] sm:$0xf] %vm1358, %v1240
      %1370 = vst.msk [vmem:[%s3 + $0x2c] sm:$0xf] %vm1358, %v1241
      %1371 = vst.msk [vmem:[%s3 + $0x30] sm:$0xf] %vm1358, %v1242
      %1372 = vst.msk [vmem:[%s3 + $0x34] sm:$0xf] %vm1358, %v1243
      %1373 = vst.msk [vmem:[%s3 + $0x38] sm:$0xf] %vm1358, %v1244
      %1374 = vst.msk [vmem:[%s3 + $0x3c] sm:$0xf] %vm1358, %v1245
      %1375 = vst.msk [vmem:[%s3 + $0x40] sm:$0xf] %vm1358, %v1246
      %1376 = vst.msk [vmem:[%s3 + $0x44] sm:$0xf] %vm1358, %v1247
      %1377 = vst.msk [vmem:[%s3 + $0x48] sm:$0xf] %vm1358, %v1248
      %1378 = vst.msk [vmem:[%s3 + $0x4c] sm:$0xf] %vm1358, %v1249
      %1379 = vst.msk [vmem:[%s3 + $0x50] sm:$0xf] %vm1358, %v1250
      %1380 = vst.msk [vmem:[%s3 + $0x54] sm:$0xf] %vm1358, %v1251
      %1381 = vst.msk [vmem:[%s3 + $0x58] sm:$0xf] %vm1358, %v1252
      %1382 = vst.msk [vmem:[%s3 + $0x5c] sm:$0xf] %vm1358, %v1253
      %1383 = vst.msk [vmem:[%s3 + $0x60] sm:$0xf] %vm1358, %v1254
      %1384 = vst.msk [vmem:[%s3 + $0x64] sm:$0xf] %vm1358, %v1255
      %1385 = vst.msk [vmem:[%s3 + $0x68] sm:$0xf] %vm1358, %v1256
      %1386 = vst.msk [vmem:[%s3 + $0x6c] sm:$0xf] %vm1358, %v1257
      %1387 = vst.msk [vmem:[%s3 + $0x70] sm:$0xf] %vm1358, %v1258
      %1388 = vst.msk [vmem:[%s3 + $0x74] sm:$0xf] %vm1358, %v1259
      %1389 = vst.msk [vmem:[%s3 + $0x78] sm:$0xf] %vm1358, %v1260
      %1390 = vst.msk [vmem:[%s3 + $0x7c] sm:$0xf] %vm1358, %v1261
      %1391 = vst.msk [vmem:[%s3 + $0x80] sm:$0xf] %vm1358, %v1262
      %1392 = vst.msk [vmem:[%s3 + $0x84] sm:$0xf] %vm1358, %v1263
      %1393 = vst.msk [vmem:[%s3 + $0x88] sm:$0xf] %vm1358, %v1264
      %1394 = vst.msk [vmem:[%s3 + $0x8c] sm:$0xf] %vm1358, %v1265
      %1395 = vst.msk [vmem:[%s3 + $0x90] sm:$0xf] %vm1358, %v1266
      %1396 = vst.msk [vmem:[%s3 + $0x94] sm:$0xf] %vm1358, %v1267
      %1397 = vst.msk [vmem:[%s3 + $0x98] sm:$0xf] %vm1358, %v1268
      %1398 = vst.msk [vmem:[%s3 + $0x9c] sm:$0xf] %vm1358, %v1269
      %1399 = vst.msk [vmem:[%s3 + $0xa0] sm:$0xf] %vm1358, %v1270
      %1400 = vst.msk [vmem:[%s3 + $0xa4] sm:$0xf] %vm1358, %v1271
      %1401 = vst.msk [vmem:[%s3 + $0xa8] sm:$0xf] %vm1358, %v1272
      %1402 = vst.msk [vmem:[%s3 + $0xac] sm:$0xf] %vm1358, %v1273
      %1403 = vst.msk [vmem:[%s3 + $0xb0] sm:$0xf] %vm1358, %v1274
      %1404 = vst.msk [vmem:[%s3 + $0xb4] sm:$0xf] %vm1358, %v1275
      %1405 = vst.msk [vmem:[%s3 + $0xb8] sm:$0xf] %vm1358, %v1276
      %1406 = vst.msk [vmem:[%s3 + $0xbc] sm:$0xf] %vm1358, %v1277
      %1407 = vst.msk [vmem:[%s3 + $0xc0] sm:$0xf] %vm1358, %v1278
      %1408 = vst.msk [vmem:[%s3 + $0xc4] sm:$0xf] %vm1358, %v1279
      %1409 = vst.msk [vmem:[%s3 + $0xc8] sm:$0xf] %vm1358, %v1280
      %1410 = vst.msk [vmem:[%s3 + $0xcc] sm:$0xf] %vm1358, %v1281
      %1411 = vst.msk [vmem:[%s3 + $0xd0] sm:$0xf] %vm1358, %v1282
      %1412 = vst.msk [vmem:[%s3 + $0xd4] sm:$0xf] %vm1358, %v1283
      %1413 = vst.msk [vmem:[%s3 + $0xd8] sm:$0xf] %vm1358, %v1284
      %1414 = vst.msk [vmem:[%s3 + $0xdc] sm:$0xf] %vm1358, %v1285
      %1415 = vst.msk [vmem:[%s3 + $0xe0] sm:$0xf] %vm1358, %v1286
      %1416 = vst.msk [vmem:[%s3 + $0xe4] sm:$0xf] %vm1358, %v1287
      %1417 = vst.msk [vmem:[%s3 + $0xe8] sm:$0xf] %vm1358, %v1288
      %1418 = vst.msk [vmem:[%s3 + $0xec] sm:$0xf] %vm1358, %v1289
      %1419 = vst.msk [vmem:[%s3 + $0xf0] sm:$0xf] %vm1358, %v1290
      %1420 = vst.msk [vmem:[%s3 + $0xf4] sm:$0xf] %vm1358, %v1291
      %1421 = vst.msk [vmem:[%s3 + $0xf8] sm:$0xf] %vm1358, %v1292
      %1422 = vst.msk [vmem:[%s3 + $0xfc] sm:$0xf] %vm1358, %v1293
    $region25: #{tpu_custom_call.1} parent=1 // pred_fallthru
      _
    // Predicated region
    $region26: #{tpu_custom_call.1} parent=1 // pred_check
      _
    $region27: #{tpu_custom_call.1} parent=1 // pred_check_branch
      %1424 = sbr.rel (0) target = $region29
    $region28: #{tpu_custom_call.1} parent=1 // pred_region
      _
    $region29: #{tpu_custom_call.1} parent=1 // pred_fallthru
      _
    // Predicated region
    $region30: #{tpu_custom_call.1} parent=1 // pred_check
      _
    $region31: #{tpu_custom_call.1} parent=1 // pred_check_branch
      %1426 = sbr.rel (0) target = $region33
    $region32: #{tpu_custom_call.1} parent=1 // pred_region
      _
    $region33: #{tpu_custom_call.1} parent=1 // pred_fallthru
      _
    %1427 = vsyncpa [#allocation4], 1

</llo_original>
